<compile_context>
chip_gen: v5e
topology: v5e:2x2
jax: 0.10.0
libtpu: 0.0.40
codegen_flags: <defaults>
</compile_context>

<pallas_src>
import functools

import jax
import jax.numpy as jnp
from jax.experimental import pallas as pl
from jax.experimental.pallas import tpu as pltpu


# ----------------------------------------------------------------------------
# Fused forward kernel: embedding gather + wavefront-fused LSTM stack + logits.
# Gate order is [i, f, o, g] (weights are stored in that column order).
# ----------------------------------------------------------------------------
def _make_rnnlm_kernel(nlayers, seq_len, batch, hid_dim):
    T, B, L, H = seq_len, batch, nlayers, hid_dim

    def kernel(*refs):
        # refs = [ids, emb, w_ih_0, b_0, ..., b_{L-1}, w_rec_fused, w_out, b_out, out]
        ids_ref, emb_ref, w_ih0_ref = refs[0], refs[1], refs[2]
        b_refs = refs[3:3 + L]
        w_rec_ref = refs[3 + L]      # (L*H, L*4H) fused block-bidiagonal recurrent weight
        w_out_ref = refs[4 + L]      # (H, V)
        b_out_ref = refs[5 + L]      # (1, V)
        out_ref = refs[6 + L]        # (T*B, V) time-major rows (t*B + b)

        V = emb_ref.shape[0]

        # ---- Embedding gather as a one-hot matmul on the MXU --------------------
        # ids are time-major: row t*B + b holds tokens[b, t].
        # NOTE: ids >= V silently yield a zero embedding row (PyTorch would raise).
        ids = ids_ref[...]                                               # (T*B, 1) int32
        col = jax.lax.broadcasted_iota(jnp.int32, (T * B, V), 1)
        one_hot = (col == ids).astype(jnp.float32)                       # (T*B, V)
        x = jnp.dot(one_hot, emb_ref[...],
                    preferred_element_type=jnp.float32)                  # (T*B, D)

        # ---- Hoisted layer-0 input projection (off the serial path) -------------
        gin0 = jnp.dot(x, w_ih0_ref[...],
                       preferred_element_type=jnp.float32) + b_refs[0][...]   # (T*B, 4H)

        # Single bf16 cast of the fused recurrent weight, hoisted out of the loop.
        w_rec = w_rec_ref[...].astype(jnp.bfloat16)                      # (L*H, L*4H)

        def sigmoid(v):
            # One EUP tanh push instead of exp + reciprocal.
            return 0.5 * jnp.tanh(0.5 * v) + 0.5

        h = [jnp.zeros((B, H), jnp.float32) for _ in range(L)]
        c = [jnp.zeros((B, H), jnp.float32) for _ in range(L)]
        hs_out = []   # last layer's hidden states, time order

        # ---- Wavefront over the layer stack: step s handles layer l at time s-l --
        for s in range(T + L - 1):
            lhs = h[0] if L == 1 else jnp.concatenate(h, axis=1)          # (B, L*H)
            fused = jnp.dot(lhs.astype(jnp.bfloat16), w_rec,
                            preferred_element_type=jnp.float32)           # (B, L*4H)
            for l in range(L):
                t = s - l
                if not (0 <= t < T):
                    continue   # static (unrolled) boundary handling
                g = fused[:, l * 4 * H:(l + 1) * 4 * H]                   # (B, 4H)
                if l == 0:
                    g = g + gin0[t * B:(t + 1) * B, :]
                else:
                    g = g + b_refs[l][...]
                # Gate order [i, f, o, g]: one sigmoid block, one tanh block.
                sig = sigmoid(g[:, :3 * H])
                i_g = sig[:, 0 * H:1 * H]
                f_g = sig[:, 1 * H:2 * H]
                o_g = sig[:, 2 * H:3 * H]
                g_g = jnp.tanh(g[:, 3 * H:])
                c[l] = f_g * c[l] + i_g * g_g
                h[l] = o_g * jnp.tanh(c[l])
                if l == L - 1:
                    hs_out.append(h[l])

        # ---- Output projection + ONE dense lane+sublane-aligned store -----------
        h_seq = jnp.concatenate(hs_out, axis=0)                           # (T*B, H) time-major
        logits = jnp.dot(h_seq, w_out_ref[...],
                         preferred_element_type=jnp.float32) + b_out_ref[...]   # (T*B, V)
        out_ref[...] = logits

    return kernel


# ----------------------------------------------------------------------------
# Full RNNLM forward (single pallas_call).
# ----------------------------------------------------------------------------
@functools.partial(jax.jit, static_argnames=("nlayers",))
def rnnlm_forward(tokens, params, nlayers):
    B, T = tokens.shape
    V, _ = params["emb"].shape
    H = params["w_hh_0"].shape[0]
    L = nlayers

    # Flat time-major token ids: row t*B + b = tokens[b, t].  Tiny int op, fuses into the jit.
    ids = jnp.transpose(tokens).reshape(T * B, 1).astype(jnp.int32)

    # Fused block-bidiagonal recurrent weight (L*H, L*4H):
    #   block (r, l) = W_hh_l if r == l, W_ih_l if r == l-1 (layers >= 1 have input dim H),
    #   zeros otherwise.  <= 64 KB; built once per call inside the jit.
    zeros_blk = jnp.zeros((H, 4 * H), jnp.float32)
    rows = []
    for r in range(L):
        row = []
        for l in range(L):
            if r == l:
                row.append(params[f"w_hh_{l}"])
            elif r == l - 1:
                row.append(params[f"w_ih_{l}"])
            else:
                row.append(zeros_blk)
        rows.append(jnp.concatenate(row, axis=1))
    w_rec = jnp.concatenate(rows, axis=0)

    args = [ids, params["emb"], params["w_ih_0"]]
    args += [params[f"b_{l}"] for l in range(L)]
    args += [w_rec, params["w_out"], params["b_out"]]

    out_tm = pl.pallas_call(
        _make_rnnlm_kernel(L, T, B, H),
        out_shape=jax.ShapeDtypeStruct((T * B, V), jnp.float32),
        in_specs=[pl.BlockSpec(memory_space=pltpu.MemorySpace.VMEM) for _ in args],
        out_specs=pl.BlockSpec(memory_space=pltpu.MemorySpace.VMEM),
    )(*args)

    # Time-major rows (t*B + b) -> PyTorch batch_first row order (b*T + t).
    # Tiny 32 KB transpose done by XLA in the wrapper (kernel store stays fully dense).
    return out_tm.reshape(T, B, V).transpose(1, 0, 2).reshape(B * T, V)


# ----------------------------------------------------------------------------
# Pure-JAX f32 reference (same [i, f, o, g] weight convention) for correctness.
# ----------------------------------------------------------------------------
def rnnlm_reference(tokens, params, nlayers):
    B, T = tokens.shape
    emb = jnp.take(params["emb"], tokens, axis=0)          # (B, T, D)
    x = jnp.transpose(emb, (1, 0, 2))                      # (T, B, D)
    H = params["w_hh_0"].shape[0]
    for layer in range(nlayers):
        w_ih = params[f"w_ih_{layer}"]
        w_hh = params[f"w_hh_{layer}"]
        b = params[f"b_{layer}"]
        h = jnp.zeros((B, H), jnp.float32)
        c = jnp.zeros((B, H), jnp.float32)
        outs = []
        for t in range(T):
            g = x[t] @ w_ih + h @ w_hh + b
            i_g = jax.nn.sigmoid(g[:, 0 * H:1 * H])
            f_g = jax.nn.sigmoid(g[:, 1 * H:2 * H])
            o_g = jax.nn.sigmoid(g[:, 2 * H:3 * H])
            g_g = jnp.tanh(g[:, 3 * H:4 * H])
            c = f_g * c + i_g * g_g
            h = o_g * jnp.tanh(c)
            outs.append(h)
        x = jnp.stack(outs, axis=0)
    h_bt = jnp.transpose(x, (1, 0, 2)).reshape(B * T, H)
    return h_bt @ params["w_out"] + params["b_out"]


def init_params(key, vocab_size, emb_dim, hid_dim, nlayers):
    params = {}
    keys = jax.random.split(key, 3 + 3 * nlayers)
    params["emb"] = 0.1 * jax.random.normal(keys[0], (vocab_size, emb_dim), jnp.float32)
    for layer in range(nlayers):
        d_in = emb_dim if layer == 0 else hid_dim
        k_ih, k_hh, k_b = keys[3 + 3 * layer: 6 + 3 * layer]
        # Stored pre-transposed vs. PyTorch ((d_in, 4H) / (H, 4H)) with gate columns in
        # [i, f, o, g] order (PyTorch uses [i, f, g, o]; importing a checkpoint requires
        # permuting the 4H blocks accordingly and transposing).
        params[f"w_ih_{layer}"] = 0.1 * jax.random.normal(k_ih, (d_in, 4 * hid_dim), jnp.float32)
        params[f"w_hh_{layer}"] = 0.1 * jax.random.normal(k_hh, (hid_dim, 4 * hid_dim), jnp.float32)
        # b_ih + b_hh folded into one bias, kept 2-D for TPU layout.
        params[f"b_{layer}"] = 0.1 * jax.random.normal(k_b, (1, 4 * hid_dim), jnp.float32)
    params["w_out"] = 0.1 * jax.random.normal(keys[1], (hid_dim, vocab_size), jnp.float32)
    params["b_out"] = 0.1 * jax.random.normal(keys[2], (1, vocab_size), jnp.float32)
    return params


if __name__ == "__main__":
    # Small shapes consistent with the module: vocab=128, emb=32, hid=32, 2 layers.
    B, T = 8, 8
    VOCAB, EMB, HID, NLAYERS = 128, 32, 32, 2

    key = jax.random.PRNGKey(0)
    k_tok, k_par = jax.random.split(key)
    tokens = jax.random.randint(k_tok, (B, T), 0, VOCAB, dtype=jnp.int32)
    params = init_params(k_par, VOCAB, EMB, HID, NLAYERS)

    logits = rnnlm_forward(tokens, params, NLAYERS)
    jax.block_until_ready(logits)

    ref = rnnlm_reference(tokens, params, NLAYERS)
    assert logits.shape == (B * T, VOCAB)
    # 1e-2 tolerance: the recurrence matmul runs as a single bf16 MXU pass in the kernel,
    # while the reference is plain f32.
    assert jnp.allclose(logits, ref, atol=1e-2, rtol=1e-2), "mismatch vs reference"

    print("KERNEL_OK")
</pallas_src>

<mosaic_0001>
module attributes {stable_mosaic.version = 11 : i64} {
  func.func @kernel(%arg0: memref<64x1xi32, #tpu.memory_space<vmem>>, %arg1: memref<128x32xf32, #tpu.memory_space<vmem>>, %arg2: memref<32x128xf32, #tpu.memory_space<vmem>>, %arg3: memref<1x128xf32, #tpu.memory_space<vmem>>, %arg4: memref<1x128xf32, #tpu.memory_space<vmem>>, %arg5: memref<64x256xf32, #tpu.memory_space<vmem>>, %arg6: memref<32x128xf32, #tpu.memory_space<vmem>>, %arg7: memref<1x128xf32, #tpu.memory_space<vmem>>, %arg8: memref<64x128xf32, #tpu.memory_space<vmem>>) attributes {dimension_semantics = [], scalar_prefetch = 0 : i64, scratch_operands = 0 : i64, tpu.core_type = #tpu.core_type<tc>} {
    %c0 = arith.constant 0 : index
    %c0_0 = arith.constant 0 : index
    %0 = vector.load %arg0[%c0, %c0_0] : memref<64x1xi32, #tpu.memory_space<vmem>>, vector<64x1xi32>
    %1 = tpu.iota {dimensions = array<i32: 1>} : vector<64x128xi32>
    %2 = vector.broadcast %0 : vector<64x1xi32> to vector<64x128xi32>
    %3 = arith.cmpi eq, %1, %2 : vector<64x128xi32>
    %4 = arith.extui %3 : vector<64x128xi1> to vector<64x128xi32>
    %5 = arith.sitofp %4 : vector<64x128xi32> to vector<64x128xf32>
    %c0_1 = arith.constant 0 : index
    %c0_2 = arith.constant 0 : index
    %6 = vector.load %arg1[%c0_1, %c0_2] : memref<128x32xf32, #tpu.memory_space<vmem>>, vector<128x32xf32>
    %cst = arith.constant dense<0.000000e+00> : vector<64x32xf32>
    %7 = tpu.matmul %5, %6, %cst {dimension_numbers = #tpu.dot_dimension_numbers<[1], [0], [0], [1], [0, 0, 1, 1], [], []>} : vector<64x128xf32>, vector<128x32xf32>, vector<64x32xf32> -> vector<64x32xf32>
    %c0_3 = arith.constant 0 : index
    %c0_4 = arith.constant 0 : index
    %8 = vector.load %arg2[%c0_3, %c0_4] : memref<32x128xf32, #tpu.memory_space<vmem>>, vector<32x128xf32>
    %cst_5 = arith.constant dense<0.000000e+00> : vector<64x128xf32>
    %9 = tpu.matmul %7, %8, %cst_5 {dimension_numbers = #tpu.dot_dimension_numbers<[1], [0], [0], [1], [0, 0, 1, 1], [], []>} : vector<64x32xf32>, vector<32x128xf32>, vector<64x128xf32> -> vector<64x128xf32>
    %c0_6 = arith.constant 0 : index
    %c0_7 = arith.constant 0 : index
    %10 = vector.load %arg3[%c0_6, %c0_7] : memref<1x128xf32, #tpu.memory_space<vmem>>, vector<1x128xf32>
    %11 = vector.broadcast %10 : vector<1x128xf32> to vector<64x128xf32>
    %12 = arith.addf %9, %11 : vector<64x128xf32>
    %c0_8 = arith.constant 0 : index
    %c0_9 = arith.constant 0 : index
    %13 = vector.load %arg5[%c0_8, %c0_9] : memref<64x256xf32, #tpu.memory_space<vmem>>, vector<64x256xf32>
    %14 = arith.truncf %13 : vector<64x256xf32> to vector<64x256xbf16>
    %cst_10 = arith.constant 0.000000e+00 : f32
    %15 = vector.broadcast %cst_10 : f32 to vector<8x32xf32>
    %cst_11 = arith.constant 0.000000e+00 : f32
    %16 = vector.broadcast %cst_11 : f32 to vector<8x32xf32>
    %cst_12 = arith.constant 0.000000e+00 : f32
    %17 = vector.broadcast %cst_12 : f32 to vector<8x32xf32>
    %cst_13 = arith.constant 0.000000e+00 : f32
    %18 = vector.broadcast %cst_13 : f32 to vector<8x32xf32>
    %19 = tpu.concatenate %15, %16 in 1 : vector<8x32xf32>, vector<8x32xf32> -> vector<8x64xf32>
    %20 = arith.truncf %19 : vector<8x64xf32> to vector<8x64xbf16>
    %cst_14 = arith.constant dense<0.000000e+00> : vector<8x256xf32>
    %21 = tpu.matmul %20, %14, %cst_14 {dimension_numbers = #tpu.dot_dimension_numbers<[1], [0], [0], [1], [0, 0, 1, 1], [], []>} : vector<8x64xbf16>, vector<64x256xbf16>, vector<8x256xf32> -> vector<8x256xf32>
    %22 = vector.extract_strided_slice %21 {offsets = [0, 0], sizes = [8, 128], strides = [1, 1]} : vector<8x256xf32> to vector<8x128xf32>
    %23 = vector.extract_strided_slice %12 {offsets = [0, 0], sizes = [8, 128], strides = [1, 1]} : vector<64x128xf32> to vector<8x128xf32>
    %24 = arith.addf %22, %23 : vector<8x128xf32>
    %25 = vector.extract_strided_slice %24 {offsets = [0, 0], sizes = [8, 96], strides = [1, 1]} : vector<8x128xf32> to vector<8x96xf32>
    %cst_15 = arith.constant 5.000000e-01 : f32
    %26 = vector.broadcast %cst_15 : f32 to vector<8x96xf32>
    %27 = arith.mulf %26, %25 : vector<8x96xf32>
    %28 = math.tanh %27 : vector<8x96xf32>
    %cst_16 = arith.constant 5.000000e-01 : f32
    %29 = vector.broadcast %cst_16 : f32 to vector<8x96xf32>
    %30 = arith.mulf %29, %28 : vector<8x96xf32>
    %cst_17 = arith.constant 5.000000e-01 : f32
    %31 = vector.broadcast %cst_17 : f32 to vector<8x96xf32>
    %32 = arith.addf %30, %31 : vector<8x96xf32>
    %33 = vector.extract_strided_slice %32 {offsets = [0, 0], sizes = [8, 32], strides = [1, 1]} : vector<8x96xf32> to vector<8x32xf32>
    %34 = vector.extract_strided_slice %32 {offsets = [0, 32], sizes = [8, 32], strides = [1, 1]} : vector<8x96xf32> to vector<8x32xf32>
    %35 = vector.extract_strided_slice %32 {offsets = [0, 64], sizes = [8, 32], strides = [1, 1]} : vector<8x96xf32> to vector<8x32xf32>
    %36 = vector.extract_strided_slice %24 {offsets = [0, 96], sizes = [8, 32], strides = [1, 1]} : vector<8x128xf32> to vector<8x32xf32>
    %37 = math.tanh %36 : vector<8x32xf32>
    %38 = arith.mulf %34, %17 : vector<8x32xf32>
    %39 = arith.mulf %33, %37 : vector<8x32xf32>
    %40 = arith.addf %38, %39 : vector<8x32xf32>
    %41 = math.tanh %40 : vector<8x32xf32>
    %42 = arith.mulf %35, %41 : vector<8x32xf32>
    %43 = tpu.concatenate %42, %16 in 1 : vector<8x32xf32>, vector<8x32xf32> -> vector<8x64xf32>
    %44 = arith.truncf %43 : vector<8x64xf32> to vector<8x64xbf16>
    %cst_18 = arith.constant dense<0.000000e+00> : vector<8x256xf32>
    %45 = tpu.matmul %44, %14, %cst_18 {dimension_numbers = #tpu.dot_dimension_numbers<[1], [0], [0], [1], [0, 0, 1, 1], [], []>} : vector<8x64xbf16>, vector<64x256xbf16>, vector<8x256xf32> -> vector<8x256xf32>
    %46 = vector.extract_strided_slice %45 {offsets = [0, 0], sizes = [8, 128], strides = [1, 1]} : vector<8x256xf32> to vector<8x128xf32>
    %47 = vector.extract_strided_slice %12 {offsets = [8, 0], sizes = [8, 128], strides = [1, 1]} : vector<64x128xf32> to vector<8x128xf32>
    %48 = arith.addf %46, %47 : vector<8x128xf32>
    %49 = vector.extract_strided_slice %48 {offsets = [0, 0], sizes = [8, 96], strides = [1, 1]} : vector<8x128xf32> to vector<8x96xf32>
    %cst_19 = arith.constant 5.000000e-01 : f32
    %50 = vector.broadcast %cst_19 : f32 to vector<8x96xf32>
    %51 = arith.mulf %50, %49 : vector<8x96xf32>
    %52 = math.tanh %51 : vector<8x96xf32>
    %cst_20 = arith.constant 5.000000e-01 : f32
    %53 = vector.broadcast %cst_20 : f32 to vector<8x96xf32>
    %54 = arith.mulf %53, %52 : vector<8x96xf32>
    %cst_21 = arith.constant 5.000000e-01 : f32
    %55 = vector.broadcast %cst_21 : f32 to vector<8x96xf32>
    %56 = arith.addf %54, %55 : vector<8x96xf32>
    %57 = vector.extract_strided_slice %56 {offsets = [0, 0], sizes = [8, 32], strides = [1, 1]} : vector<8x96xf32> to vector<8x32xf32>
    %58 = vector.extract_strided_slice %56 {offsets = [0, 32], sizes = [8, 32], strides = [1, 1]} : vector<8x96xf32> to vector<8x32xf32>
    %59 = vector.extract_strided_slice %56 {offsets = [0, 64], sizes = [8, 32], strides = [1, 1]} : vector<8x96xf32> to vector<8x32xf32>
    %60 = vector.extract_strided_slice %48 {offsets = [0, 96], sizes = [8, 32], strides = [1, 1]} : vector<8x128xf32> to vector<8x32xf32>
    %61 = math.tanh %60 : vector<8x32xf32>
    %62 = arith.mulf %58, %40 : vector<8x32xf32>
    %63 = arith.mulf %57, %61 : vector<8x32xf32>
    %64 = arith.addf %62, %63 : vector<8x32xf32>
    %65 = math.tanh %64 : vector<8x32xf32>
    %66 = arith.mulf %59, %65 : vector<8x32xf32>
    %67 = vector.extract_strided_slice %45 {offsets = [0, 128], sizes = [8, 128], strides = [1, 1]} : vector<8x256xf32> to vector<8x128xf32>
    %c0_22 = arith.constant 0 : index
    %c0_23 = arith.constant 0 : index
    %68 = vector.load %arg4[%c0_22, %c0_23] : memref<1x128xf32, #tpu.memory_space<vmem>>, vector<1x128xf32>
    %69 = vector.broadcast %68 : vector<1x128xf32> to vector<8x128xf32>
    %70 = arith.addf %67, %69 : vector<8x128xf32>
    %71 = vector.extract_strided_slice %70 {offsets = [0, 0], sizes = [8, 96], strides = [1, 1]} : vector<8x128xf32> to vector<8x96xf32>
    %cst_24 = arith.constant 5.000000e-01 : f32
    %72 = vector.broadcast %cst_24 : f32 to vector<8x96xf32>
    %73 = arith.mulf %72, %71 : vector<8x96xf32>
    %74 = math.tanh %73 : vector<8x96xf32>
    %cst_25 = arith.constant 5.000000e-01 : f32
    %75 = vector.broadcast %cst_25 : f32 to vector<8x96xf32>
    %76 = arith.mulf %75, %74 : vector<8x96xf32>
    %cst_26 = arith.constant 5.000000e-01 : f32
    %77 = vector.broadcast %cst_26 : f32 to vector<8x96xf32>
    %78 = arith.addf %76, %77 : vector<8x96xf32>
    %79 = vector.extract_strided_slice %78 {offsets = [0, 0], sizes = [8, 32], strides = [1, 1]} : vector<8x96xf32> to vector<8x32xf32>
    %80 = vector.extract_strided_slice %78 {offsets = [0, 32], sizes = [8, 32], strides = [1, 1]} : vector<8x96xf32> to vector<8x32xf32>
    %81 = vector.extract_strided_slice %78 {offsets = [0, 64], sizes = [8, 32], strides = [1, 1]} : vector<8x96xf32> to vector<8x32xf32>
    %82 = vector.extract_strided_slice %70 {offsets = [0, 96], sizes = [8, 32], strides = [1, 1]} : vector<8x128xf32> to vector<8x32xf32>
    %83 = math.tanh %82 : vector<8x32xf32>
    %84 = arith.mulf %80, %18 : vector<8x32xf32>
    %85 = arith.mulf %79, %83 : vector<8x32xf32>
    %86 = arith.addf %84, %85 : vector<8x32xf32>
    %87 = math.tanh %86 : vector<8x32xf32>
    %88 = arith.mulf %81, %87 : vector<8x32xf32>
    %89 = tpu.concatenate %66, %88 in 1 : vector<8x32xf32>, vector<8x32xf32> -> vector<8x64xf32>
    %90 = arith.truncf %89 : vector<8x64xf32> to vector<8x64xbf16>
    %cst_27 = arith.constant dense<0.000000e+00> : vector<8x256xf32>
    %91 = tpu.matmul %90, %14, %cst_27 {dimension_numbers = #tpu.dot_dimension_numbers<[1], [0], [0], [1], [0, 0, 1, 1], [], []>} : vector<8x64xbf16>, vector<64x256xbf16>, vector<8x256xf32> -> vector<8x256xf32>
    %92 = vector.extract_strided_slice %91 {offsets = [0, 0], sizes = [8, 128], strides = [1, 1]} : vector<8x256xf32> to vector<8x128xf32>
    %93 = vector.extract_strided_slice %12 {offsets = [16, 0], sizes = [8, 128], strides = [1, 1]} : vector<64x128xf32> to vector<8x128xf32>
    %94 = arith.addf %92, %93 : vector<8x128xf32>
    %95 = vector.extract_strided_slice %94 {offsets = [0, 0], sizes = [8, 96], strides = [1, 1]} : vector<8x128xf32> to vector<8x96xf32>
    %cst_28 = arith.constant 5.000000e-01 : f32
    %96 = vector.broadcast %cst_28 : f32 to vector<8x96xf32>
    %97 = arith.mulf %96, %95 : vector<8x96xf32>
    %98 = math.tanh %97 : vector<8x96xf32>
    %cst_29 = arith.constant 5.000000e-01 : f32
    %99 = vector.broadcast %cst_29 : f32 to vector<8x96xf32>
    %100 = arith.mulf %99, %98 : vector<8x96xf32>
    %cst_30 = arith.constant 5.000000e-01 : f32
    %101 = vector.broadcast %cst_30 : f32 to vector<8x96xf32>
    %102 = arith.addf %100, %101 : vector<8x96xf32>
    %103 = vector.extract_strided_slice %102 {offsets = [0, 0], sizes = [8, 32], strides = [1, 1]} : vector<8x96xf32> to vector<8x32xf32>
    %104 = vector.extract_strided_slice %102 {offsets = [0, 32], sizes = [8, 32], strides = [1, 1]} : vector<8x96xf32> to vector<8x32xf32>
    %105 = vector.extract_strided_slice %102 {offsets = [0, 64], sizes = [8, 32], strides = [1, 1]} : vector<8x96xf32> to vector<8x32xf32>
    %106 = vector.extract_strided_slice %94 {offsets = [0, 96], sizes = [8, 32], strides = [1, 1]} : vector<8x128xf32> to vector<8x32xf32>
    %107 = math.tanh %106 : vector<8x32xf32>
    %108 = arith.mulf %104, %64 : vector<8x32xf32>
    %109 = arith.mulf %103, %107 : vector<8x32xf32>
    %110 = arith.addf %108, %109 : vector<8x32xf32>
    %111 = math.tanh %110 : vector<8x32xf32>
    %112 = arith.mulf %105, %111 : vector<8x32xf32>
    %113 = vector.extract_strided_slice %91 {offsets = [0, 128], sizes = [8, 128], strides = [1, 1]} : vector<8x256xf32> to vector<8x128xf32>
    %c0_31 = arith.constant 0 : index
    %c0_32 = arith.constant 0 : index
    %114 = vector.load %arg4[%c0_31, %c0_32] : memref<1x128xf32, #tpu.memory_space<vmem>>, vector<1x128xf32>
    %115 = vector.broadcast %114 : vector<1x128xf32> to vector<8x128xf32>
    %116 = arith.addf %113, %115 : vector<8x128xf32>
    %117 = vector.extract_strided_slice %116 {offsets = [0, 0], sizes = [8, 96], strides = [1, 1]} : vector<8x128xf32> to vector<8x96xf32>
    %cst_33 = arith.constant 5.000000e-01 : f32
    %118 = vector.broadcast %cst_33 : f32 to vector<8x96xf32>
    %119 = arith.mulf %118, %117 : vector<8x96xf32>
    %120 = math.tanh %119 : vector<8x96xf32>
    %cst_34 = arith.constant 5.000000e-01 : f32
    %121 = vector.broadcast %cst_34 : f32 to vector<8x96xf32>
    %122 = arith.mulf %121, %120 : vector<8x96xf32>
    %cst_35 = arith.constant 5.000000e-01 : f32
    %123 = vector.broadcast %cst_35 : f32 to vector<8x96xf32>
    %124 = arith.addf %122, %123 : vector<8x96xf32>
    %125 = vector.extract_strided_slice %124 {offsets = [0, 0], sizes = [8, 32], strides = [1, 1]} : vector<8x96xf32> to vector<8x32xf32>
    %126 = vector.extract_strided_slice %124 {offsets = [0, 32], sizes = [8, 32], strides = [1, 1]} : vector<8x96xf32> to vector<8x32xf32>
    %127 = vector.extract_strided_slice %124 {offsets = [0, 64], sizes = [8, 32], strides = [1, 1]} : vector<8x96xf32> to vector<8x32xf32>
    %128 = vector.extract_strided_slice %116 {offsets = [0, 96], sizes = [8, 32], strides = [1, 1]} : vector<8x128xf32> to vector<8x32xf32>
    %129 = math.tanh %128 : vector<8x32xf32>
    %130 = arith.mulf %126, %86 : vector<8x32xf32>
    %131 = arith.mulf %125, %129 : vector<8x32xf32>
    %132 = arith.addf %130, %131 : vector<8x32xf32>
    %133 = math.tanh %132 : vector<8x32xf32>
    %134 = arith.mulf %127, %133 : vector<8x32xf32>
    %135 = tpu.concatenate %112, %134 in 1 : vector<8x32xf32>, vector<8x32xf32> -> vector<8x64xf32>
    %136 = arith.truncf %135 : vector<8x64xf32> to vector<8x64xbf16>
    %cst_36 = arith.constant dense<0.000000e+00> : vector<8x256xf32>
    %137 = tpu.matmul %136, %14, %cst_36 {dimension_numbers = #tpu.dot_dimension_numbers<[1], [0], [0], [1], [0, 0, 1, 1], [], []>} : vector<8x64xbf16>, vector<64x256xbf16>, vector<8x256xf32> -> vector<8x256xf32>
    %138 = vector.extract_strided_slice %137 {offsets = [0, 0], sizes = [8, 128], strides = [1, 1]} : vector<8x256xf32> to vector<8x128xf32>
    %139 = vector.extract_strided_slice %12 {offsets = [24, 0], sizes = [8, 128], strides = [1, 1]} : vector<64x128xf32> to vector<8x128xf32>
    %140 = arith.addf %138, %139 : vector<8x128xf32>
    %141 = vector.extract_strided_slice %140 {offsets = [0, 0], sizes = [8, 96], strides = [1, 1]} : vector<8x128xf32> to vector<8x96xf32>
    %cst_37 = arith.constant 5.000000e-01 : f32
    %142 = vector.broadcast %cst_37 : f32 to vector<8x96xf32>
    %143 = arith.mulf %142, %141 : vector<8x96xf32>
    %144 = math.tanh %143 : vector<8x96xf32>
    %cst_38 = arith.constant 5.000000e-01 : f32
    %145 = vector.broadcast %cst_38 : f32 to vector<8x96xf32>
    %146 = arith.mulf %145, %144 : vector<8x96xf32>
    %cst_39 = arith.constant 5.000000e-01 : f32
    %147 = vector.broadcast %cst_39 : f32 to vector<8x96xf32>
    %148 = arith.addf %146, %147 : vector<8x96xf32>
    %149 = vector.extract_strided_slice %148 {offsets = [0, 0], sizes = [8, 32], strides = [1, 1]} : vector<8x96xf32> to vector<8x32xf32>
    %150 = vector.extract_strided_slice %148 {offsets = [0, 32], sizes = [8, 32], strides = [1, 1]} : vector<8x96xf32> to vector<8x32xf32>
    %151 = vector.extract_strided_slice %148 {offsets = [0, 64], sizes = [8, 32], strides = [1, 1]} : vector<8x96xf32> to vector<8x32xf32>
    %152 = vector.extract_strided_slice %140 {offsets = [0, 96], sizes = [8, 32], strides = [1, 1]} : vector<8x128xf32> to vector<8x32xf32>
    %153 = math.tanh %152 : vector<8x32xf32>
    %154 = arith.mulf %150, %110 : vector<8x32xf32>
    %155 = arith.mulf %149, %153 : vector<8x32xf32>
    %156 = arith.addf %154, %155 : vector<8x32xf32>
    %157 = math.tanh %156 : vector<8x32xf32>
    %158 = arith.mulf %151, %157 : vector<8x32xf32>
    %159 = vector.extract_strided_slice %137 {offsets = [0, 128], sizes = [8, 128], strides = [1, 1]} : vector<8x256xf32> to vector<8x128xf32>
    %c0_40 = arith.constant 0 : index
    %c0_41 = arith.constant 0 : index
    %160 = vector.load %arg4[%c0_40, %c0_41] : memref<1x128xf32, #tpu.memory_space<vmem>>, vector<1x128xf32>
    %161 = vector.broadcast %160 : vector<1x128xf32> to vector<8x128xf32>
    %162 = arith.addf %159, %161 : vector<8x128xf32>
    %163 = vector.extract_strided_slice %162 {offsets = [0, 0], sizes = [8, 96], strides = [1, 1]} : vector<8x128xf32> to vector<8x96xf32>
    %cst_42 = arith.constant 5.000000e-01 : f32
    %164 = vector.broadcast %cst_42 : f32 to vector<8x96xf32>
    %165 = arith.mulf %164, %163 : vector<8x96xf32>
    %166 = math.tanh %165 : vector<8x96xf32>
    %cst_43 = arith.constant 5.000000e-01 : f32
    %167 = vector.broadcast %cst_43 : f32 to vector<8x96xf32>
    %168 = arith.mulf %167, %166 : vector<8x96xf32>
    %cst_44 = arith.constant 5.000000e-01 : f32
    %169 = vector.broadcast %cst_44 : f32 to vector<8x96xf32>
    %170 = arith.addf %168, %169 : vector<8x96xf32>
    %171 = vector.extract_strided_slice %170 {offsets = [0, 0], sizes = [8, 32], strides = [1, 1]} : vector<8x96xf32> to vector<8x32xf32>
    %172 = vector.extract_strided_slice %170 {offsets = [0, 32], sizes = [8, 32], strides = [1, 1]} : vector<8x96xf32> to vector<8x32xf32>
    %173 = vector.extract_strided_slice %170 {offsets = [0, 64], sizes = [8, 32], strides = [1, 1]} : vector<8x96xf32> to vector<8x32xf32>
    %174 = vector.extract_strided_slice %162 {offsets = [0, 96], sizes = [8, 32], strides = [1, 1]} : vector<8x128xf32> to vector<8x32xf32>
    %175 = math.tanh %174 : vector<8x32xf32>
    %176 = arith.mulf %172, %132 : vector<8x32xf32>
    %177 = arith.mulf %171, %175 : vector<8x32xf32>
    %178 = arith.addf %176, %177 : vector<8x32xf32>
    %179 = math.tanh %178 : vector<8x32xf32>
    %180 = arith.mulf %173, %179 : vector<8x32xf32>
    %181 = tpu.concatenate %158, %180 in 1 : vector<8x32xf32>, vector<8x32xf32> -> vector<8x64xf32>
    %182 = arith.truncf %181 : vector<8x64xf32> to vector<8x64xbf16>
    %cst_45 = arith.constant dense<0.000000e+00> : vector<8x256xf32>
    %183 = tpu.matmul %182, %14, %cst_45 {dimension_numbers = #tpu.dot_dimension_numbers<[1], [0], [0], [1], [0, 0, 1, 1], [], []>} : vector<8x64xbf16>, vector<64x256xbf16>, vector<8x256xf32> -> vector<8x256xf32>
    %184 = vector.extract_strided_slice %183 {offsets = [0, 0], sizes = [8, 128], strides = [1, 1]} : vector<8x256xf32> to vector<8x128xf32>
    %185 = vector.extract_strided_slice %12 {offsets = [32, 0], sizes = [8, 128], strides = [1, 1]} : vector<64x128xf32> to vector<8x128xf32>
    %186 = arith.addf %184, %185 : vector<8x128xf32>
    %187 = vector.extract_strided_slice %186 {offsets = [0, 0], sizes = [8, 96], strides = [1, 1]} : vector<8x128xf32> to vector<8x96xf32>
    %cst_46 = arith.constant 5.000000e-01 : f32
    %188 = vector.broadcast %cst_46 : f32 to vector<8x96xf32>
    %189 = arith.mulf %188, %187 : vector<8x96xf32>
    %190 = math.tanh %189 : vector<8x96xf32>
    %cst_47 = arith.constant 5.000000e-01 : f32
    %191 = vector.broadcast %cst_47 : f32 to vector<8x96xf32>
    %192 = arith.mulf %191, %190 : vector<8x96xf32>
    %cst_48 = arith.constant 5.000000e-01 : f32
    %193 = vector.broadcast %cst_48 : f32 to vector<8x96xf32>
    %194 = arith.addf %192, %193 : vector<8x96xf32>
    %195 = vector.extract_strided_slice %194 {offsets = [0, 0], sizes = [8, 32], strides = [1, 1]} : vector<8x96xf32> to vector<8x32xf32>
    %196 = vector.extract_strided_slice %194 {offsets = [0, 32], sizes = [8, 32], strides = [1, 1]} : vector<8x96xf32> to vector<8x32xf32>
    %197 = vector.extract_strided_slice %194 {offsets = [0, 64], sizes = [8, 32], strides = [1, 1]} : vector<8x96xf32> to vector<8x32xf32>
    %198 = vector.extract_strided_slice %186 {offsets = [0, 96], sizes = [8, 32], strides = [1, 1]} : vector<8x128xf32> to vector<8x32xf32>
    %199 = math.tanh %198 : vector<8x32xf32>
    %200 = arith.mulf %196, %156 : vector<8x32xf32>
    %201 = arith.mulf %195, %199 : vector<8x32xf32>
    %202 = arith.addf %200, %201 : vector<8x32xf32>
    %203 = math.tanh %202 : vector<8x32xf32>
    %204 = arith.mulf %197, %203 : vector<8x32xf32>
    %205 = vector.extract_strided_slice %183 {offsets = [0, 128], sizes = [8, 128], strides = [1, 1]} : vector<8x256xf32> to vector<8x128xf32>
    %c0_49 = arith.constant 0 : index
    %c0_50 = arith.constant 0 : index
    %206 = vector.load %arg4[%c0_49, %c0_50] : memref<1x128xf32, #tpu.memory_space<vmem>>, vector<1x128xf32>
    %207 = vector.broadcast %206 : vector<1x128xf32> to vector<8x128xf32>
    %208 = arith.addf %205, %207 : vector<8x128xf32>
    %209 = vector.extract_strided_slice %208 {offsets = [0, 0], sizes = [8, 96], strides = [1, 1]} : vector<8x128xf32> to vector<8x96xf32>
    %cst_51 = arith.constant 5.000000e-01 : f32
    %210 = vector.broadcast %cst_51 : f32 to vector<8x96xf32>
    %211 = arith.mulf %210, %209 : vector<8x96xf32>
    %212 = math.tanh %211 : vector<8x96xf32>
    %cst_52 = arith.constant 5.000000e-01 : f32
    %213 = vector.broadcast %cst_52 : f32 to vector<8x96xf32>
    %214 = arith.mulf %213, %212 : vector<8x96xf32>
    %cst_53 = arith.constant 5.000000e-01 : f32
    %215 = vector.broadcast %cst_53 : f32 to vector<8x96xf32>
    %216 = arith.addf %214, %215 : vector<8x96xf32>
    %217 = vector.extract_strided_slice %216 {offsets = [0, 0], sizes = [8, 32], strides = [1, 1]} : vector<8x96xf32> to vector<8x32xf32>
    %218 = vector.extract_strided_slice %216 {offsets = [0, 32], sizes = [8, 32], strides = [1, 1]} : vector<8x96xf32> to vector<8x32xf32>
    %219 = vector.extract_strided_slice %216 {offsets = [0, 64], sizes = [8, 32], strides = [1, 1]} : vector<8x96xf32> to vector<8x32xf32>
    %220 = vector.extract_strided_slice %208 {offsets = [0, 96], sizes = [8, 32], strides = [1, 1]} : vector<8x128xf32> to vector<8x32xf32>
    %221 = math.tanh %220 : vector<8x32xf32>
    %222 = arith.mulf %218, %178 : vector<8x32xf32>
    %223 = arith.mulf %217, %221 : vector<8x32xf32>
    %224 = arith.addf %222, %223 : vector<8x32xf32>
    %225 = math.tanh %224 : vector<8x32xf32>
    %226 = arith.mulf %219, %225 : vector<8x32xf32>
    %227 = tpu.concatenate %204, %226 in 1 : vector<8x32xf32>, vector<8x32xf32> -> vector<8x64xf32>
    %228 = arith.truncf %227 : vector<8x64xf32> to vector<8x64xbf16>
    %cst_54 = arith.constant dense<0.000000e+00> : vector<8x256xf32>
    %229 = tpu.matmul %228, %14, %cst_54 {dimension_numbers = #tpu.dot_dimension_numbers<[1], [0], [0], [1], [0, 0, 1, 1], [], []>} : vector<8x64xbf16>, vector<64x256xbf16>, vector<8x256xf32> -> vector<8x256xf32>
    %230 = vector.extract_strided_slice %229 {offsets = [0, 0], sizes = [8, 128], strides = [1, 1]} : vector<8x256xf32> to vector<8x128xf32>
    %231 = vector.extract_strided_slice %12 {offsets = [40, 0], sizes = [8, 128], strides = [1, 1]} : vector<64x128xf32> to vector<8x128xf32>
    %232 = arith.addf %230, %231 : vector<8x128xf32>
    %233 = vector.extract_strided_slice %232 {offsets = [0, 0], sizes = [8, 96], strides = [1, 1]} : vector<8x128xf32> to vector<8x96xf32>
    %cst_55 = arith.constant 5.000000e-01 : f32
    %234 = vector.broadcast %cst_55 : f32 to vector<8x96xf32>
    %235 = arith.mulf %234, %233 : vector<8x96xf32>
    %236 = math.tanh %235 : vector<8x96xf32>
    %cst_56 = arith.constant 5.000000e-01 : f32
    %237 = vector.broadcast %cst_56 : f32 to vector<8x96xf32>
    %238 = arith.mulf %237, %236 : vector<8x96xf32>
    %cst_57 = arith.constant 5.000000e-01 : f32
    %239 = vector.broadcast %cst_57 : f32 to vector<8x96xf32>
    %240 = arith.addf %238, %239 : vector<8x96xf32>
    %241 = vector.extract_strided_slice %240 {offsets = [0, 0], sizes = [8, 32], strides = [1, 1]} : vector<8x96xf32> to vector<8x32xf32>
    %242 = vector.extract_strided_slice %240 {offsets = [0, 32], sizes = [8, 32], strides = [1, 1]} : vector<8x96xf32> to vector<8x32xf32>
    %243 = vector.extract_strided_slice %240 {offsets = [0, 64], sizes = [8, 32], strides = [1, 1]} : vector<8x96xf32> to vector<8x32xf32>
    %244 = vector.extract_strided_slice %232 {offsets = [0, 96], sizes = [8, 32], strides = [1, 1]} : vector<8x128xf32> to vector<8x32xf32>
    %245 = math.tanh %244 : vector<8x32xf32>
    %246 = arith.mulf %242, %202 : vector<8x32xf32>
    %247 = arith.mulf %241, %245 : vector<8x32xf32>
    %248 = arith.addf %246, %247 : vector<8x32xf32>
    %249 = math.tanh %248 : vector<8x32xf32>
    %250 = arith.mulf %243, %249 : vector<8x32xf32>
    %251 = vector.extract_strided_slice %229 {offsets = [0, 128], sizes = [8, 128], strides = [1, 1]} : vector<8x256xf32> to vector<8x128xf32>
    %c0_58 = arith.constant 0 : index
    %c0_59 = arith.constant 0 : index
    %252 = vector.load %arg4[%c0_58, %c0_59] : memref<1x128xf32, #tpu.memory_space<vmem>>, vector<1x128xf32>
    %253 = vector.broadcast %252 : vector<1x128xf32> to vector<8x128xf32>
    %254 = arith.addf %251, %253 : vector<8x128xf32>
    %255 = vector.extract_strided_slice %254 {offsets = [0, 0], sizes = [8, 96], strides = [1, 1]} : vector<8x128xf32> to vector<8x96xf32>
    %cst_60 = arith.constant 5.000000e-01 : f32
    %256 = vector.broadcast %cst_60 : f32 to vector<8x96xf32>
    %257 = arith.mulf %256, %255 : vector<8x96xf32>
    %258 = math.tanh %257 : vector<8x96xf32>
    %cst_61 = arith.constant 5.000000e-01 : f32
    %259 = vector.broadcast %cst_61 : f32 to vector<8x96xf32>
    %260 = arith.mulf %259, %258 : vector<8x96xf32>
    %cst_62 = arith.constant 5.000000e-01 : f32
    %261 = vector.broadcast %cst_62 : f32 to vector<8x96xf32>
    %262 = arith.addf %260, %261 : vector<8x96xf32>
    %263 = vector.extract_strided_slice %262 {offsets = [0, 0], sizes = [8, 32], strides = [1, 1]} : vector<8x96xf32> to vector<8x32xf32>
    %264 = vector.extract_strided_slice %262 {offsets = [0, 32], sizes = [8, 32], strides = [1, 1]} : vector<8x96xf32> to vector<8x32xf32>
    %265 = vector.extract_strided_slice %262 {offsets = [0, 64], sizes = [8, 32], strides = [1, 1]} : vector<8x96xf32> to vector<8x32xf32>
    %266 = vector.extract_strided_slice %254 {offsets = [0, 96], sizes = [8, 32], strides = [1, 1]} : vector<8x128xf32> to vector<8x32xf32>
    %267 = math.tanh %266 : vector<8x32xf32>
    %268 = arith.mulf %264, %224 : vector<8x32xf32>
    %269 = arith.mulf %263, %267 : vector<8x32xf32>
    %270 = arith.addf %268, %269 : vector<8x32xf32>
    %271 = math.tanh %270 : vector<8x32xf32>
    %272 = arith.mulf %265, %271 : vector<8x32xf32>
    %273 = tpu.concatenate %250, %272 in 1 : vector<8x32xf32>, vector<8x32xf32> -> vector<8x64xf32>
    %274 = arith.truncf %273 : vector<8x64xf32> to vector<8x64xbf16>
    %cst_63 = arith.constant dense<0.000000e+00> : vector<8x256xf32>
    %275 = tpu.matmul %274, %14, %cst_63 {dimension_numbers = #tpu.dot_dimension_numbers<[1], [0], [0], [1], [0, 0, 1, 1], [], []>} : vector<8x64xbf16>, vector<64x256xbf16>, vector<8x256xf32> -> vector<8x256xf32>
    %276 = vector.extract_strided_slice %275 {offsets = [0, 0], sizes = [8, 128], strides = [1, 1]} : vector<8x256xf32> to vector<8x128xf32>
    %277 = vector.extract_strided_slice %12 {offsets = [48, 0], sizes = [8, 128], strides = [1, 1]} : vector<64x128xf32> to vector<8x128xf32>
    %278 = arith.addf %276, %277 : vector<8x128xf32>
    %279 = vector.extract_strided_slice %278 {offsets = [0, 0], sizes = [8, 96], strides = [1, 1]} : vector<8x128xf32> to vector<8x96xf32>
    %cst_64 = arith.constant 5.000000e-01 : f32
    %280 = vector.broadcast %cst_64 : f32 to vector<8x96xf32>
    %281 = arith.mulf %280, %279 : vector<8x96xf32>
    %282 = math.tanh %281 : vector<8x96xf32>
    %cst_65 = arith.constant 5.000000e-01 : f32
    %283 = vector.broadcast %cst_65 : f32 to vector<8x96xf32>
    %284 = arith.mulf %283, %282 : vector<8x96xf32>
    %cst_66 = arith.constant 5.000000e-01 : f32
    %285 = vector.broadcast %cst_66 : f32 to vector<8x96xf32>
    %286 = arith.addf %284, %285 : vector<8x96xf32>
    %287 = vector.extract_strided_slice %286 {offsets = [0, 0], sizes = [8, 32], strides = [1, 1]} : vector<8x96xf32> to vector<8x32xf32>
    %288 = vector.extract_strided_slice %286 {offsets = [0, 32], sizes = [8, 32], strides = [1, 1]} : vector<8x96xf32> to vector<8x32xf32>
    %289 = vector.extract_strided_slice %286 {offsets = [0, 64], sizes = [8, 32], strides = [1, 1]} : vector<8x96xf32> to vector<8x32xf32>
    %290 = vector.extract_strided_slice %278 {offsets = [0, 96], sizes = [8, 32], strides = [1, 1]} : vector<8x128xf32> to vector<8x32xf32>
    %291 = math.tanh %290 : vector<8x32xf32>
    %292 = arith.mulf %288, %248 : vector<8x32xf32>
    %293 = arith.mulf %287, %291 : vector<8x32xf32>
    %294 = arith.addf %292, %293 : vector<8x32xf32>
    %295 = math.tanh %294 : vector<8x32xf32>
    %296 = arith.mulf %289, %295 : vector<8x32xf32>
    %297 = vector.extract_strided_slice %275 {offsets = [0, 128], sizes = [8, 128], strides = [1, 1]} : vector<8x256xf32> to vector<8x128xf32>
    %c0_67 = arith.constant 0 : index
    %c0_68 = arith.constant 0 : index
    %298 = vector.load %arg4[%c0_67, %c0_68] : memref<1x128xf32, #tpu.memory_space<vmem>>, vector<1x128xf32>
    %299 = vector.broadcast %298 : vector<1x128xf32> to vector<8x128xf32>
    %300 = arith.addf %297, %299 : vector<8x128xf32>
    %301 = vector.extract_strided_slice %300 {offsets = [0, 0], sizes = [8, 96], strides = [1, 1]} : vector<8x128xf32> to vector<8x96xf32>
    %cst_69 = arith.constant 5.000000e-01 : f32
    %302 = vector.broadcast %cst_69 : f32 to vector<8x96xf32>
    %303 = arith.mulf %302, %301 : vector<8x96xf32>
    %304 = math.tanh %303 : vector<8x96xf32>
    %cst_70 = arith.constant 5.000000e-01 : f32
    %305 = vector.broadcast %cst_70 : f32 to vector<8x96xf32>
    %306 = arith.mulf %305, %304 : vector<8x96xf32>
    %cst_71 = arith.constant 5.000000e-01 : f32
    %307 = vector.broadcast %cst_71 : f32 to vector<8x96xf32>
    %308 = arith.addf %306, %307 : vector<8x96xf32>
    %309 = vector.extract_strided_slice %308 {offsets = [0, 0], sizes = [8, 32], strides = [1, 1]} : vector<8x96xf32> to vector<8x32xf32>
    %310 = vector.extract_strided_slice %308 {offsets = [0, 32], sizes = [8, 32], strides = [1, 1]} : vector<8x96xf32> to vector<8x32xf32>
    %311 = vector.extract_strided_slice %308 {offsets = [0, 64], sizes = [8, 32], strides = [1, 1]} : vector<8x96xf32> to vector<8x32xf32>
    %312 = vector.extract_strided_slice %300 {offsets = [0, 96], sizes = [8, 32], strides = [1, 1]} : vector<8x128xf32> to vector<8x32xf32>
    %313 = math.tanh %312 : vector<8x32xf32>
    %314 = arith.mulf %310, %270 : vector<8x32xf32>
    %315 = arith.mulf %309, %313 : vector<8x32xf32>
    %316 = arith.addf %314, %315 : vector<8x32xf32>
    %317 = math.tanh %316 : vector<8x32xf32>
    %318 = arith.mulf %311, %317 : vector<8x32xf32>
    %319 = tpu.concatenate %296, %318 in 1 : vector<8x32xf32>, vector<8x32xf32> -> vector<8x64xf32>
    %320 = arith.truncf %319 : vector<8x64xf32> to vector<8x64xbf16>
    %cst_72 = arith.constant dense<0.000000e+00> : vector<8x256xf32>
    %321 = tpu.matmul %320, %14, %cst_72 {dimension_numbers = #tpu.dot_dimension_numbers<[1], [0], [0], [1], [0, 0, 1, 1], [], []>} : vector<8x64xbf16>, vector<64x256xbf16>, vector<8x256xf32> -> vector<8x256xf32>
    %322 = vector.extract_strided_slice %321 {offsets = [0, 0], sizes = [8, 128], strides = [1, 1]} : vector<8x256xf32> to vector<8x128xf32>
    %323 = vector.extract_strided_slice %12 {offsets = [56, 0], sizes = [8, 128], strides = [1, 1]} : vector<64x128xf32> to vector<8x128xf32>
    %324 = arith.addf %322, %323 : vector<8x128xf32>
    %325 = vector.extract_strided_slice %324 {offsets = [0, 0], sizes = [8, 96], strides = [1, 1]} : vector<8x128xf32> to vector<8x96xf32>
    %cst_73 = arith.constant 5.000000e-01 : f32
    %326 = vector.broadcast %cst_73 : f32 to vector<8x96xf32>
    %327 = arith.mulf %326, %325 : vector<8x96xf32>
    %328 = math.tanh %327 : vector<8x96xf32>
    %cst_74 = arith.constant 5.000000e-01 : f32
    %329 = vector.broadcast %cst_74 : f32 to vector<8x96xf32>
    %330 = arith.mulf %329, %328 : vector<8x96xf32>
    %cst_75 = arith.constant 5.000000e-01 : f32
    %331 = vector.broadcast %cst_75 : f32 to vector<8x96xf32>
    %332 = arith.addf %330, %331 : vector<8x96xf32>
    %333 = vector.extract_strided_slice %332 {offsets = [0, 0], sizes = [8, 32], strides = [1, 1]} : vector<8x96xf32> to vector<8x32xf32>
    %334 = vector.extract_strided_slice %332 {offsets = [0, 32], sizes = [8, 32], strides = [1, 1]} : vector<8x96xf32> to vector<8x32xf32>
    %335 = vector.extract_strided_slice %332 {offsets = [0, 64], sizes = [8, 32], strides = [1, 1]} : vector<8x96xf32> to vector<8x32xf32>
    %336 = vector.extract_strided_slice %324 {offsets = [0, 96], sizes = [8, 32], strides = [1, 1]} : vector<8x128xf32> to vector<8x32xf32>
    %337 = math.tanh %336 : vector<8x32xf32>
    %338 = arith.mulf %334, %294 : vector<8x32xf32>
    %339 = arith.mulf %333, %337 : vector<8x32xf32>
    %340 = arith.addf %338, %339 : vector<8x32xf32>
    %341 = math.tanh %340 : vector<8x32xf32>
    %342 = arith.mulf %335, %341 : vector<8x32xf32>
    %343 = vector.extract_strided_slice %321 {offsets = [0, 128], sizes = [8, 128], strides = [1, 1]} : vector<8x256xf32> to vector<8x128xf32>
    %c0_76 = arith.constant 0 : index
    %c0_77 = arith.constant 0 : index
    %344 = vector.load %arg4[%c0_76, %c0_77] : memref<1x128xf32, #tpu.memory_space<vmem>>, vector<1x128xf32>
    %345 = vector.broadcast %344 : vector<1x128xf32> to vector<8x128xf32>
    %346 = arith.addf %343, %345 : vector<8x128xf32>
    %347 = vector.extract_strided_slice %346 {offsets = [0, 0], sizes = [8, 96], strides = [1, 1]} : vector<8x128xf32> to vector<8x96xf32>
    %cst_78 = arith.constant 5.000000e-01 : f32
    %348 = vector.broadcast %cst_78 : f32 to vector<8x96xf32>
    %349 = arith.mulf %348, %347 : vector<8x96xf32>
    %350 = math.tanh %349 : vector<8x96xf32>
    %cst_79 = arith.constant 5.000000e-01 : f32
    %351 = vector.broadcast %cst_79 : f32 to vector<8x96xf32>
    %352 = arith.mulf %351, %350 : vector<8x96xf32>
    %cst_80 = arith.constant 5.000000e-01 : f32
    %353 = vector.broadcast %cst_80 : f32 to vector<8x96xf32>
    %354 = arith.addf %352, %353 : vector<8x96xf32>
    %355 = vector.extract_strided_slice %354 {offsets = [0, 0], sizes = [8, 32], strides = [1, 1]} : vector<8x96xf32> to vector<8x32xf32>
    %356 = vector.extract_strided_slice %354 {offsets = [0, 32], sizes = [8, 32], strides = [1, 1]} : vector<8x96xf32> to vector<8x32xf32>
    %357 = vector.extract_strided_slice %354 {offsets = [0, 64], sizes = [8, 32], strides = [1, 1]} : vector<8x96xf32> to vector<8x32xf32>
    %358 = vector.extract_strided_slice %346 {offsets = [0, 96], sizes = [8, 32], strides = [1, 1]} : vector<8x128xf32> to vector<8x32xf32>
    %359 = math.tanh %358 : vector<8x32xf32>
    %360 = arith.mulf %356, %316 : vector<8x32xf32>
    %361 = arith.mulf %355, %359 : vector<8x32xf32>
    %362 = arith.addf %360, %361 : vector<8x32xf32>
    %363 = math.tanh %362 : vector<8x32xf32>
    %364 = arith.mulf %357, %363 : vector<8x32xf32>
    %365 = tpu.concatenate %342, %364 in 1 : vector<8x32xf32>, vector<8x32xf32> -> vector<8x64xf32>
    %366 = arith.truncf %365 : vector<8x64xf32> to vector<8x64xbf16>
    %cst_81 = arith.constant dense<0.000000e+00> : vector<8x256xf32>
    %367 = tpu.matmul %366, %14, %cst_81 {dimension_numbers = #tpu.dot_dimension_numbers<[1], [0], [0], [1], [0, 0, 1, 1], [], []>} : vector<8x64xbf16>, vector<64x256xbf16>, vector<8x256xf32> -> vector<8x256xf32>
    %368 = vector.extract_strided_slice %367 {offsets = [0, 128], sizes = [8, 128], strides = [1, 1]} : vector<8x256xf32> to vector<8x128xf32>
    %c0_82 = arith.constant 0 : index
    %c0_83 = arith.constant 0 : index
    %369 = vector.load %arg4[%c0_82, %c0_83] : memref<1x128xf32, #tpu.memory_space<vmem>>, vector<1x128xf32>
    %370 = vector.broadcast %369 : vector<1x128xf32> to vector<8x128xf32>
    %371 = arith.addf %368, %370 : vector<8x128xf32>
    %372 = vector.extract_strided_slice %371 {offsets = [0, 0], sizes = [8, 96], strides = [1, 1]} : vector<8x128xf32> to vector<8x96xf32>
    %cst_84 = arith.constant 5.000000e-01 : f32
    %373 = vector.broadcast %cst_84 : f32 to vector<8x96xf32>
    %374 = arith.mulf %373, %372 : vector<8x96xf32>
    %375 = math.tanh %374 : vector<8x96xf32>
    %cst_85 = arith.constant 5.000000e-01 : f32
    %376 = vector.broadcast %cst_85 : f32 to vector<8x96xf32>
    %377 = arith.mulf %376, %375 : vector<8x96xf32>
    %cst_86 = arith.constant 5.000000e-01 : f32
    %378 = vector.broadcast %cst_86 : f32 to vector<8x96xf32>
    %379 = arith.addf %377, %378 : vector<8x96xf32>
    %380 = vector.extract_strided_slice %379 {offsets = [0, 0], sizes = [8, 32], strides = [1, 1]} : vector<8x96xf32> to vector<8x32xf32>
    %381 = vector.extract_strided_slice %379 {offsets = [0, 32], sizes = [8, 32], strides = [1, 1]} : vector<8x96xf32> to vector<8x32xf32>
    %382 = vector.extract_strided_slice %379 {offsets = [0, 64], sizes = [8, 32], strides = [1, 1]} : vector<8x96xf32> to vector<8x32xf32>
    %383 = vector.extract_strided_slice %371 {offsets = [0, 96], sizes = [8, 32], strides = [1, 1]} : vector<8x128xf32> to vector<8x32xf32>
    %384 = math.tanh %383 : vector<8x32xf32>
    %385 = arith.mulf %381, %362 : vector<8x32xf32>
    %386 = arith.mulf %380, %384 : vector<8x32xf32>
    %387 = arith.addf %385, %386 : vector<8x32xf32>
    %388 = math.tanh %387 : vector<8x32xf32>
    %389 = arith.mulf %382, %388 : vector<8x32xf32>
    %390 = tpu.concatenate %88, %134, %180, %226, %272, %318, %364, %389 in 0 : vector<8x32xf32>, vector<8x32xf32>, vector<8x32xf32>, vector<8x32xf32>, vector<8x32xf32>, vector<8x32xf32>, vector<8x32xf32>, vector<8x32xf32> -> vector<64x32xf32>
    %c0_87 = arith.constant 0 : index
    %c0_88 = arith.constant 0 : index
    %391 = vector.load %arg6[%c0_87, %c0_88] : memref<32x128xf32, #tpu.memory_space<vmem>>, vector<32x128xf32>
    %cst_89 = arith.constant dense<0.000000e+00> : vector<64x128xf32>
    %392 = tpu.matmul %390, %391, %cst_89 {dimension_numbers = #tpu.dot_dimension_numbers<[1], [0], [0], [1], [0, 0, 1, 1], [], []>} : vector<64x32xf32>, vector<32x128xf32>, vector<64x128xf32> -> vector<64x128xf32>
    %c0_90 = arith.constant 0 : index
    %c0_91 = arith.constant 0 : index
    %393 = vector.load %arg7[%c0_90, %c0_91] : memref<1x128xf32, #tpu.memory_space<vmem>>, vector<1x128xf32>
    %394 = vector.broadcast %393 : vector<1x128xf32> to vector<64x128xf32>
    %395 = arith.addf %392, %394 : vector<64x128xf32>
    %c0_92 = arith.constant 0 : index
    %c0_93 = arith.constant 0 : index
    %396 = vector.load %arg8[%c0_92, %c0_93] : memref<64x128xf32, #tpu.memory_space<vmem>>, vector<64x128xf32>
    tpu.vector_store %arg8[%c0_92, %c0_93], %395 {strides = array<i32>} : memref<64x128xf32, #tpu.memory_space<vmem>>, vector<64x128xf32>,
    return
  }
}

</mosaic_0001>

<llo_original>
// kernel: rnnlm_forward.1
$region0: #{rnnlm_forward.1}
  #allocation0 [shape = 'u32[]', space=smem, size = 0x4, offset = 0x4, fixed_abs, tag = 'smem constant byte address 0x4 - core index']
  #allocation1 [shape = 'u32[72,128]{1,0:T(1,128)}', space=vmem, size = 0x9000, scoped, tag = 'internal scratch']
  %s0 = inlined_call_operand.vmem [shape: s32[64,1], index: 0, kind: input, shape index: {}]
  %s1 = inlined_call_operand.vmem [shape: f32[128,32], index: 1, kind: input, shape index: {}]
  %s2 = inlined_call_operand.vmem [shape: f32[32,128], index: 2, kind: input, shape index: {}]
  %s3 = inlined_call_operand.vmem [shape: f32[1,128], index: 3, kind: input, shape index: {}]
  %s4 = inlined_call_operand.vmem [shape: f32[1,128], index: 4, kind: input, shape index: {}]
  %s5 = inlined_call_operand.vmem [shape: f32[64,256], index: 5, kind: input, shape index: {}]
  %s6 = inlined_call_operand.vmem [shape: f32[32,128], index: 6, kind: input, shape index: {}]
  %s7 = inlined_call_operand.vmem [shape: f32[1,128], index: 7, kind: input, shape index: {}]
  %s8 = inlined_call_operand.vmem [shape: f32[64,128], index: 8, kind: output, shape index: {}]
  %s9 = sld [smem:[#allocation0]]
  $region42: #{rnnlm_forward.1} parent=0
    _
  %s11 = ssub.s32 1, %s9
  %s12 = scalar_select 0, %s11, %s9
  // Predicated region
  $region2: #{rnnlm_forward.1} parent=0 // pred_check
    _
  $region3: #{rnnlm_forward.1} parent=0 // pred_check_branch
    %14 = sbr.rel (0) target = $region5
  $region4: #{rnnlm_forward.1} parent=0 // pred_region
    _
  $region5: #{rnnlm_forward.1} parent=0 // pred_fallthru
    _
  // Predicated region
  $region6: #{rnnlm_forward.1} parent=0 // pred_check
    _
  $region7: #{rnnlm_forward.1} parent=0 // pred_check_branch
    %16 = sbr.rel (0) target = $region9
  $region8: #{rnnlm_forward.1} parent=0 // pred_region
    _
  $region9: #{rnnlm_forward.1} parent=0 // pred_fallthru
    _
  // Predicated region
  $region10: #{rnnlm_forward.1} parent=0 // pred_check
    _
  $region11: #{rnnlm_forward.1} parent=0 // pred_check_branch
    %18 = sbr.rel (0) target = $region13
  $region12: #{rnnlm_forward.1} parent=0 // pred_region
    _
  $region13: #{rnnlm_forward.1} parent=0 // pred_fallthru
    _
  // Predicated region
  $region14: #{rnnlm_forward.1} parent=0 // pred_check
    _
  $region15: #{rnnlm_forward.1} parent=0 // pred_check_branch
    %20 = sbr.rel (0) target = $region17
  $region16: #{rnnlm_forward.1} parent=0 // pred_region
    _
  $region17: #{rnnlm_forward.1} parent=0 // pred_fallthru
    _
  // Predicated region
  $region18: #{rnnlm_forward.1} parent=0 // pred_check
    _
  $region19: #{rnnlm_forward.1} parent=0 // pred_check_branch
    %22 = sbr.rel (0) target = $region21
  $region20: #{rnnlm_forward.1} parent=0 // pred_region
    _
  $region21: #{rnnlm_forward.1} parent=0 // pred_fallthru
    _
  // Predicated region
  $region22: #{rnnlm_forward.1} parent=0 // pred_check
    _
  $region23: #{rnnlm_forward.1} parent=0 // pred_check_branch
    %24 = sbr.rel (0) target = $region25
  $region24: #{rnnlm_forward.1} parent=0 // pred_region
    _
  $region25: #{rnnlm_forward.1} parent=0 // pred_fallthru
    _
  // Predicated region
  $region26: #{rnnlm_forward.1} parent=0 // pred_check
    _
  $region27: #{rnnlm_forward.1} parent=0 // pred_check_branch
    %26 = sbr.rel (0) target = $region29
  $region28: #{rnnlm_forward.1} parent=0 // pred_region
    _
  $region29: #{rnnlm_forward.1} parent=0 // pred_fallthru
    _
  // Predicated region
  $region30: #{rnnlm_forward.1} parent=0 // pred_check
    _
  $region31: #{rnnlm_forward.1} parent=0 // pred_check_branch
    %28 = sbr.rel (0) target = $region33
  $region32: #{rnnlm_forward.1} parent=0 // pred_region
    _
  $region33: #{rnnlm_forward.1} parent=0 // pred_fallthru
    _
  %v30 = vld [vmem:[%s0] sm:$0xff]
  %v31 = vld [vmem:[%s0 + $0x8] sm:$0xff]
  %v32 = vld [vmem:[%s0 + $0x10] sm:$0xff]
  %v33 = vld [vmem:[%s0 + $0x18] sm:$0xff]
  %v34 = vld [vmem:[%s0 + $0x20] sm:$0xff]
  %v35 = vld [vmem:[%s0 + $0x28] sm:$0xff]
  %v36 = vld [vmem:[%s0 + $0x30] sm:$0xff]
  %v37 = vld [vmem:[%s0 + $0x38] sm:$0xff]
  %v38 = vlaneseq
  %v39 = vand.u32 %v38, 127
  %40 = vset.pattern.permute.xlu0 0
  %41 = vperm.xlu0 %40, %v30
  %v42 = vpop.permute.xlu0 %41
  %43 = vset.pattern.permute.xlu0 0
  %44 = vperm.xlu0 %43, %v31
  %v45 = vpop.permute.xlu0 %44
  %46 = vset.pattern.permute.xlu0 0
  %47 = vperm.xlu0 %46, %v32
  %v48 = vpop.permute.xlu0 %47
  %49 = vset.pattern.permute.xlu0 0
  %50 = vperm.xlu0 %49, %v33
  %v51 = vpop.permute.xlu0 %50
  %52 = vset.pattern.permute.xlu0 0
  %53 = vperm.xlu0 %52, %v34
  %v54 = vpop.permute.xlu0 %53
  %55 = vset.pattern.permute.xlu0 0
  %56 = vperm.xlu0 %55, %v35
  %v57 = vpop.permute.xlu0 %56
  %58 = vset.pattern.permute.xlu0 0
  %59 = vperm.xlu0 %58, %v36
  %v60 = vpop.permute.xlu0 %59
  %61 = vset.pattern.permute.xlu0 0
  %62 = vperm.xlu0 %61, %v37
  %v63 = vpop.permute.xlu0 %62
  %vm64 = vcmp.eq.s32.totalorder %v39, %v42
  %vm65 = vcmp.eq.s32.totalorder %v39, %v45
  %vm66 = vcmp.eq.s32.totalorder %v39, %v48
  %vm67 = vcmp.eq.s32.totalorder %v39, %v51
  %vm68 = vcmp.eq.s32.totalorder %v39, %v54
  %vm69 = vcmp.eq.s32.totalorder %v39, %v57
  %vm70 = vcmp.eq.s32.totalorder %v39, %v60
  %vm71 = vcmp.eq.s32.totalorder %v39, %v63
  %v72 = vsel %vm64, 1, 0
  %v73 = vsel %vm65, 1, 0
  %v74 = vsel %vm66, 1, 0
  %v75 = vsel %vm67, 1, 0
  %v76 = vsel %vm68, 1, 0
  %v77 = vsel %vm69, 1, 0
  %v78 = vsel %vm70, 1, 0
  %v79 = vsel %vm71, 1, 0
  %v80 = vcvt.s32.f32 %v72
  %v81 = vcvt.s32.f32 %v73
  %v82 = vcvt.s32.f32 %v74
  %v83 = vcvt.s32.f32 %v75
  %v84 = vcvt.s32.f32 %v76
  %v85 = vcvt.s32.f32 %v77
  %v86 = vcvt.s32.f32 %v78
  %v87 = vcvt.s32.f32 %v79
  %v88 = vld [vmem:[%s1] sm:$0xff]
  %v89 = vld [vmem:[%s1 + $0x8] sm:$0xff]
  %v90 = vld [vmem:[%s1 + $0x10] sm:$0xff]
  %v91 = vld [vmem:[%s1 + $0x18] sm:$0xff]
  %v92 = vld [vmem:[%s1 + $0x20] sm:$0xff]
  %v93 = vld [vmem:[%s1 + $0x28] sm:$0xff]
  %v94 = vld [vmem:[%s1 + $0x30] sm:$0xff]
  %v95 = vld [vmem:[%s1 + $0x38] sm:$0xff]
  %v96 = vld [vmem:[%s1 + $0x40] sm:$0xff]
  %v97 = vld [vmem:[%s1 + $0x48] sm:$0xff]
  %v98 = vld [vmem:[%s1 + $0x50] sm:$0xff]
  %v99 = vld [vmem:[%s1 + $0x58] sm:$0xff]
  %v100 = vld [vmem:[%s1 + $0x60] sm:$0xff]
  %v101 = vld [vmem:[%s1 + $0x68] sm:$0xff]
  %v102 = vld [vmem:[%s1 + $0x70] sm:$0xff]
  %v103 = vld [vmem:[%s1 + $0x78] sm:$0xff]
  %104 = vmatpush.msra.mxu0 %v103
  %105 = vmatpush.msra.mxu0 %v102
  %106 = vmatpush.msra.mxu0 %v101
  %107 = vmatpush.msra.mxu0 %v100
  %108 = vmatpush.msra.mxu0 %v99
  %109 = vmatpush.msra.mxu0 %v98
  %110 = vmatpush.msra.mxu0 %v97
  %111 = vmatpush.msra.mxu0 %v96
  %112 = vmatpush.msra.mxu0 %v95
  %113 = vmatpush.msra.mxu0 %v94
  %114 = vmatpush.msra.mxu0 %v93
  %115 = vmatpush.msra.mxu0 %v92
  %116 = vmatpush.msra.mxu0 %v91
  %117 = vmatpush.msra.mxu0 %v90
  %118 = vmatpush.msra.mxu0 %v89
  %119 = vmatpush.msra.mxu0 %v88
  %120 = vmatmul.f32.gmra.mxu0 %v80
  %v121 = vpop.f32.mrf.mxu0
  %v122 = vadd.f32 0.0, %v121
  %123 = vmatmul.f32.gmra.mxu0 %v81
  %v124 = vpop.f32.mrf.mxu0
  %v125 = vadd.f32 0.0, %v124
  %126 = vmatmul.f32.gmra.mxu0 %v82
  %v127 = vpop.f32.mrf.mxu0
  %v128 = vadd.f32 0.0, %v127
  %129 = vmatmul.f32.gmra.mxu0 %v83
  %v130 = vpop.f32.mrf.mxu0
  %v131 = vadd.f32 0.0, %v130
  %132 = vmatmul.f32.gmra.mxu0 %v84
  %v133 = vpop.f32.mrf.mxu0
  %v134 = vadd.f32 0.0, %v133
  %135 = vmatmul.f32.gmra.mxu0 %v85
  %v136 = vpop.f32.mrf.mxu0
  %v137 = vadd.f32 0.0, %v136
  %138 = vmatmul.f32.gmra.mxu0 %v86
  %v139 = vpop.f32.mrf.mxu0
  %v140 = vadd.f32 0.0, %v139
  %141 = vmatmul.f32.gmra.mxu0 %v87
  %v142 = vpop.f32.mrf.mxu0
  %v143 = vadd.f32 0.0, %v142
  %144 = vdwg.mxu0
  %v145 = vld [vmem:[%s2] sm:$0xff]
  %v146 = vld [vmem:[%s2 + $0x8] sm:$0xff]
  %v147 = vld [vmem:[%s2 + $0x10] sm:$0xff]
  %v148 = vld [vmem:[%s2 + $0x18] sm:$0xff]
  %v149 = vld [vmem:[%s3] sm:$0x1]
  %v151 = vperm.slane %v149, 0
  %vm153 = vcmask 261120
  %v155 = vsel %vm153, %v122, 0
  %v158 = vsel %vm153, %v125, 0
  %v161 = vsel %vm153, %v128, 0
  %v164 = vsel %vm153, %v131, 0
  %v167 = vsel %vm153, %v134, 0
  %v170 = vsel %vm153, %v137, 0
  %v173 = vsel %vm153, %v140, 0
  %v176 = vsel %vm153, %v143, 0
  %178 = vmatpush.msra.mxu0 0.0
  %179 = vmatpush.msra.mxu0 0.0
  %180 = vmatpush.msra.mxu0 0.0
  %181 = vmatpush.msra.mxu0 0.0
  %182 = vmatpush.msra.mxu0 0.0
  %183 = vmatpush.msra.mxu0 0.0
  %184 = vmatpush.msra.mxu0 0.0
  %185 = vmatpush.msra.mxu0 0.0
  %186 = vmatpush.msra.mxu0 0.0
  %187 = vmatpush.msra.mxu0 0.0
  %188 = vmatpush.msra.mxu0 0.0
  %189 = vmatpush.msra.mxu0 0.0
  %190 = vmatpush.msra.mxu0 %v148
  %191 = vmatpush.msra.mxu0 %v147
  %192 = vmatpush.msra.mxu0 %v146
  %193 = vmatpush.msra.mxu0 %v145
  %194 = vmatmul.f32.gmra.mxu0 %v155
  %v195 = vpop.f32.mrf.mxu0
  %v196 = vadd.f32 %v151, %v195
  %197 = vmatmul.f32.gmra.mxu0 %v158
  %v198 = vpop.f32.mrf.mxu0
  %v199 = vadd.f32 %v151, %v198
  %200 = vmatmul.f32.gmra.mxu0 %v161
  %v201 = vpop.f32.mrf.mxu0
  %v202 = vadd.f32 %v151, %v201
  %203 = vmatmul.f32.gmra.mxu0 %v164
  %v204 = vpop.f32.mrf.mxu0
  %v205 = vadd.f32 %v151, %v204
  %206 = vmatmul.f32.gmra.mxu0 %v167
  %v207 = vpop.f32.mrf.mxu0
  %v208 = vadd.f32 %v151, %v207
  %209 = vmatmul.f32.gmra.mxu0 %v170
  %v210 = vpop.f32.mrf.mxu0
  %v211 = vadd.f32 %v151, %v210
  %212 = vmatmul.f32.gmra.mxu0 %v173
  %v213 = vpop.f32.mrf.mxu0
  %v214 = vadd.f32 %v151, %v213
  %215 = vmatmul.f32.gmra.mxu0 %v176
  %v216 = vpop.f32.mrf.mxu0
  %v217 = vadd.f32 %v151, %v216
  %218 = vdwg.mxu0
  %v219 = vld [vmem:[%s5] sm:$0xff]
  %v220 = vld [vmem:[%s5 + $0x8] sm:$0xff]
  %v221 = vld [vmem:[%s5 + $0x10] sm:$0xff]
  %v222 = vld [vmem:[%s5 + $0x18] sm:$0xff]
  %v223 = vld [vmem:[%s5 + $0x20] sm:$0xff]
  %v224 = vld [vmem:[%s5 + $0x28] sm:$0xff]
  %v225 = vld [vmem:[%s5 + $0x30] sm:$0xff]
  %v226 = vld [vmem:[%s5 + $0x38] sm:$0xff]
  %v227 = vld [vmem:[%s5 + $0x40] sm:$0xff]
  %v228 = vld [vmem:[%s5 + $0x48] sm:$0xff]
  %v229 = vld [vmem:[%s5 + $0x50] sm:$0xff]
  %v230 = vld [vmem:[%s5 + $0x58] sm:$0xff]
  %v231 = vld [vmem:[%s5 + $0x60] sm:$0xff]
  %v232 = vld [vmem:[%s5 + $0x68] sm:$0xff]
  %v233 = vld [vmem:[%s5 + $0x70] sm:$0xff]
  %v234 = vld [vmem:[%s5 + $0x78] sm:$0xff]
  %v235 = vpack.c.bf16 %v221, %v219
  %v236 = vpack.c.bf16 %v222, %v220
  %v237 = vpack.c.bf16 %v225, %v223
  %v238 = vpack.c.bf16 %v226, %v224
  %v239 = vpack.c.bf16 %v229, %v227
  %v240 = vpack.c.bf16 %v230, %v228
  %v241 = vpack.c.bf16 %v233, %v231
  %v242 = vpack.c.bf16 %v234, %v232
  %v243 = vpack.c.bf16 0.0, 0.0
  %vm244 = vcmask 523264
  %v246 = vsel %vm244, %v243, 0
  %248 = vmatpush.bf16.msra.mxu0 0
  %249 = vmatpush.bf16.msra.mxu0 0
  %250 = vmatpush.bf16.msra.mxu0 0
  %251 = vmatpush.bf16.msra.mxu0 0
  %252 = vmatpush.bf16.msra.mxu0 %v241
  %253 = vmatpush.bf16.msra.mxu0 %v239
  %254 = vmatpush.bf16.msra.mxu0 %v237
  %255 = vmatpush.bf16.msra.mxu0 %v235
  %256 = vmatmul.bf16.gmra.mxu0 %v246
  %v257 = vpop.f32.mrf.mxu0
  %v258 = vadd.f32 0.0, %v257
  %v259 = vpop.f32.mrf.mxu0
  %260 = vdwg.mxu0
  %v261 = vadd.f32 %v258, %v196
  %v262 = vmul.f32 %v261, 0.5
  %v263 = vtanh.pop %v262
  %v264 = vmul.f32 %v263, 0.5
  %v265 = vadd.f32 %v264, 0.5
  %v266 = vtanh.pop %v261
  %v267 = vmul.f32 %v265, 0.0
  %269 = vrot.lane.b32.xlu0 %v266, 32
  %v270 = vpop.permute.xlu0 %269
  %v272 = vmul.f32 %v265, %v270
  %274 = vrot.lane.b32.xlu0 %v272, 32
  %v275 = vpop.permute.xlu0 %274
  %v277 = vadd.f32 %v267, %v275
  %v278 = vtanh.pop %v277
  %280 = vrot.lane.b32.xlu0 %v278, 32
  %v281 = vpop.permute.xlu0 %280
  %v283 = vmul.f32 %v265, %v281
  %285 = vrot.lane.b32.xlu0 %v283, 64
  %v286 = vpop.permute.xlu0 %285
  %v288 = vsel %vm153, %v286, 0.0
  %v289 = vpack.c.bf16 %v288, %v288
  %v291 = vsel %vm244, %v289, 0
  %293 = vmatpush.bf16.msra.mxu0 0
  %294 = vmatpush.bf16.msra.mxu0 0
  %295 = vmatpush.bf16.msra.mxu0 0
  %296 = vmatpush.bf16.msra.mxu0 0
  %297 = vmatpush.bf16.msra.mxu0 %v241
  %298 = vmatpush.bf16.msra.mxu0 %v239
  %299 = vmatpush.bf16.msra.mxu0 %v237
  %300 = vmatpush.bf16.msra.mxu0 %v235
  %301 = vmatmul.bf16.gmra.mxu0 %v291
  %v302 = vpop.f32.mrf.mxu0
  %v303 = vadd.f32 0.0, %v302
  %v304 = vpop.f32.mrf.mxu0
  %305 = vdwg.mxu0
  %306 = vmatpush.bf16.msra.mxu0 0
  %307 = vmatpush.bf16.msra.mxu0 0
  %308 = vmatpush.bf16.msra.mxu0 0
  %309 = vmatpush.bf16.msra.mxu0 0
  %310 = vmatpush.bf16.msra.mxu0 %v242
  %311 = vmatpush.bf16.msra.mxu0 %v240
  %312 = vmatpush.bf16.msra.mxu0 %v238
  %313 = vmatpush.bf16.msra.mxu0 %v236
  %314 = vmatmul.bf16.gmra.mxu0 %v291
  %v315 = vpop.f32.mrf.mxu0
  %v316 = vadd.f32 0.0, %v315
  %v317 = vpop.f32.mrf.mxu0
  %318 = vdwg.mxu0
  %v319 = vadd.f32 %v303, %v199
  %v320 = vmul.f32 %v319, 0.5
  %v321 = vtanh.pop %v320
  %v322 = vmul.f32 %v321, 0.5
  %v323 = vadd.f32 %v322, 0.5
  %v324 = vtanh.pop %v319
  %v325 = vmul.f32 %v323, %v277
  %327 = vrot.lane.b32.xlu0 %v324, 32
  %v328 = vpop.permute.xlu0 %327
  %v330 = vmul.f32 %v323, %v328
  %332 = vrot.lane.b32.xlu0 %v330, 32
  %v333 = vpop.permute.xlu0 %332
  %v335 = vadd.f32 %v325, %v333
  %v336 = vtanh.pop %v335
  %338 = vrot.lane.b32.xlu0 %v336, 32
  %v339 = vpop.permute.xlu0 %338
  %v341 = vmul.f32 %v323, %v339
  %v342 = vld [vmem:[%s4] sm:$0x1]
  %v344 = vperm.slane %v342, 0
  %v346 = vadd.f32 %v316, %v344
  %v347 = vmul.f32 %v346, 0.5
  %v348 = vtanh.pop %v347
  %v349 = vmul.f32 %v348, 0.5
  %v350 = vadd.f32 %v349, 0.5
  %v351 = vtanh.pop %v346
  %v352 = vmul.f32 %v350, 0.0
  %354 = vrot.lane.b32.xlu0 %v351, 32
  %v355 = vpop.permute.xlu0 %354
  %v357 = vmul.f32 %v350, %v355
  %359 = vrot.lane.b32.xlu0 %v357, 32
  %v360 = vpop.permute.xlu0 %359
  %v362 = vadd.f32 %v352, %v360
  %v363 = vtanh.pop %v362
  %365 = vrot.lane.b32.xlu0 %v363, 32
  %v366 = vpop.permute.xlu0 %365
  %v368 = vmul.f32 %v350, %v366
  %370 = vrot.lane.b32.xlu0 %v341, 64
  %v371 = vpop.permute.xlu0 %370
  %374 = vrot.lane.b32.xlu0 %v368, 96
  %v375 = vpop.permute.xlu0 %374
  %v377 = vsel %vm153, %v371, %v375
  %v378 = vpack.c.bf16 %v377, %v377
  %v380 = vsel %vm244, %v378, 0
  %382 = vmatpush.bf16.msra.mxu0 0
  %383 = vmatpush.bf16.msra.mxu0 0
  %384 = vmatpush.bf16.msra.mxu0 0
  %385 = vmatpush.bf16.msra.mxu0 0
  %386 = vmatpush.bf16.msra.mxu0 %v241
  %387 = vmatpush.bf16.msra.mxu0 %v239
  %388 = vmatpush.bf16.msra.mxu0 %v237
  %389 = vmatpush.bf16.msra.mxu0 %v235
  %390 = vmatmul.bf16.gmra.mxu0 %v380
  %v391 = vpop.f32.mrf.mxu0
  %v392 = vadd.f32 0.0, %v391
  %v393 = vpop.f32.mrf.mxu0
  %394 = vdwg.mxu0
  %395 = vmatpush.bf16.msra.mxu0 0
  %396 = vmatpush.bf16.msra.mxu0 0
  %397 = vmatpush.bf16.msra.mxu0 0
  %398 = vmatpush.bf16.msra.mxu0 0
  %399 = vmatpush.bf16.msra.mxu0 %v242
  %400 = vmatpush.bf16.msra.mxu0 %v240
  %401 = vmatpush.bf16.msra.mxu0 %v238
  %402 = vmatpush.bf16.msra.mxu0 %v236
  %403 = vmatmul.bf16.gmra.mxu0 %v380
  %v404 = vpop.f32.mrf.mxu0
  %v405 = vadd.f32 0.0, %v404
  %v406 = vpop.f32.mrf.mxu0
  %407 = vdwg.mxu0
  %v408 = vadd.f32 %v392, %v202
  %v409 = vmul.f32 %v408, 0.5
  %v410 = vtanh.pop %v409
  %v411 = vmul.f32 %v410, 0.5
  %v412 = vadd.f32 %v411, 0.5
  %v413 = vtanh.pop %v408
  %v414 = vmul.f32 %v412, %v335
  %416 = vrot.lane.b32.xlu0 %v413, 32
  %v417 = vpop.permute.xlu0 %416
  %v419 = vmul.f32 %v412, %v417
  %421 = vrot.lane.b32.xlu0 %v419, 32
  %v422 = vpop.permute.xlu0 %421
  %v424 = vadd.f32 %v414, %v422
  %v425 = vtanh.pop %v424
  %427 = vrot.lane.b32.xlu0 %v425, 32
  %v428 = vpop.permute.xlu0 %427
  %v430 = vmul.f32 %v412, %v428
  %v431 = vadd.f32 %v405, %v344
  %v432 = vmul.f32 %v431, 0.5
  %v433 = vtanh.pop %v432
  %v434 = vmul.f32 %v433, 0.5
  %v435 = vadd.f32 %v434, 0.5
  %v436 = vtanh.pop %v431
  %v437 = vmul.f32 %v435, %v362
  %439 = vrot.lane.b32.xlu0 %v436, 32
  %v440 = vpop.permute.xlu0 %439
  %v442 = vmul.f32 %v435, %v440
  %444 = vrot.lane.b32.xlu0 %v442, 32
  %v445 = vpop.permute.xlu0 %444
  %v447 = vadd.f32 %v437, %v445
  %v448 = vtanh.pop %v447
  %450 = vrot.lane.b32.xlu0 %v448, 32
  %v451 = vpop.permute.xlu0 %450
  %v453 = vmul.f32 %v435, %v451
  %455 = vrot.lane.b32.xlu0 %v430, 64
  %v456 = vpop.permute.xlu0 %455
  %459 = vrot.lane.b32.xlu0 %v453, 96
  %v460 = vpop.permute.xlu0 %459
  %v462 = vsel %vm153, %v456, %v460
  %v463 = vpack.c.bf16 %v462, %v462
  %v465 = vsel %vm244, %v463, 0
  %467 = vmatpush.bf16.msra.mxu0 0
  %468 = vmatpush.bf16.msra.mxu0 0
  %469 = vmatpush.bf16.msra.mxu0 0
  %470 = vmatpush.bf16.msra.mxu0 0
  %471 = vmatpush.bf16.msra.mxu0 %v241
  %472 = vmatpush.bf16.msra.mxu0 %v239
  %473 = vmatpush.bf16.msra.mxu0 %v237
  %474 = vmatpush.bf16.msra.mxu0 %v235
  %475 = vmatmul.bf16.gmra.mxu0 %v465
  %v476 = vpop.f32.mrf.mxu0
  %v477 = vadd.f32 0.0, %v476
  %v478 = vpop.f32.mrf.mxu0
  %479 = vdwg.mxu0
  %480 = vmatpush.bf16.msra.mxu0 0
  %481 = vmatpush.bf16.msra.mxu0 0
  %482 = vmatpush.bf16.msra.mxu0 0
  %483 = vmatpush.bf16.msra.mxu0 0
  %484 = vmatpush.bf16.msra.mxu0 %v242
  %485 = vmatpush.bf16.msra.mxu0 %v240
  %486 = vmatpush.bf16.msra.mxu0 %v238
  %487 = vmatpush.bf16.msra.mxu0 %v236
  %488 = vmatmul.bf16.gmra.mxu0 %v465
  %v489 = vpop.f32.mrf.mxu0
  %v490 = vadd.f32 0.0, %v489
  %v491 = vpop.f32.mrf.mxu0
  %492 = vdwg.mxu0
  %v493 = vadd.f32 %v477, %v205
  %v494 = vmul.f32 %v493, 0.5
  %v495 = vtanh.pop %v494
  %v496 = vmul.f32 %v495, 0.5
  %v497 = vadd.f32 %v496, 0.5
  %v498 = vtanh.pop %v493
  %v499 = vmul.f32 %v497, %v424
  %501 = vrot.lane.b32.xlu0 %v498, 32
  %v502 = vpop.permute.xlu0 %501
  %v504 = vmul.f32 %v497, %v502
  %506 = vrot.lane.b32.xlu0 %v504, 32
  %v507 = vpop.permute.xlu0 %506
  %v509 = vadd.f32 %v499, %v507
  %v510 = vtanh.pop %v509
  %512 = vrot.lane.b32.xlu0 %v510, 32
  %v513 = vpop.permute.xlu0 %512
  %v515 = vmul.f32 %v497, %v513
  %v516 = vadd.f32 %v490, %v344
  %v517 = vmul.f32 %v516, 0.5
  %v518 = vtanh.pop %v517
  %v519 = vmul.f32 %v518, 0.5
  %v520 = vadd.f32 %v519, 0.5
  %v521 = vtanh.pop %v516
  %v522 = vmul.f32 %v520, %v447
  %524 = vrot.lane.b32.xlu0 %v521, 32
  %v525 = vpop.permute.xlu0 %524
  %v527 = vmul.f32 %v520, %v525
  %529 = vrot.lane.b32.xlu0 %v527, 32
  %v530 = vpop.permute.xlu0 %529
  %v532 = vadd.f32 %v522, %v530
  %v533 = vtanh.pop %v532
  %535 = vrot.lane.b32.xlu0 %v533, 32
  %v536 = vpop.permute.xlu0 %535
  %v538 = vmul.f32 %v520, %v536
  %540 = vrot.lane.b32.xlu0 %v515, 64
  %v541 = vpop.permute.xlu0 %540
  %544 = vrot.lane.b32.xlu0 %v538, 96
  %v545 = vpop.permute.xlu0 %544
  %v547 = vsel %vm153, %v541, %v545
  %v548 = vpack.c.bf16 %v547, %v547
  %v550 = vsel %vm244, %v548, 0
  %552 = vmatpush.bf16.msra.mxu0 0
  %553 = vmatpush.bf16.msra.mxu0 0
  %554 = vmatpush.bf16.msra.mxu0 0
  %555 = vmatpush.bf16.msra.mxu0 0
  %556 = vmatpush.bf16.msra.mxu0 %v241
  %557 = vmatpush.bf16.msra.mxu0 %v239
  %558 = vmatpush.bf16.msra.mxu0 %v237
  %559 = vmatpush.bf16.msra.mxu0 %v235
  %560 = vmatmul.bf16.gmra.mxu0 %v550
  %v561 = vpop.f32.mrf.mxu0
  %v562 = vadd.f32 0.0, %v561
  %v563 = vpop.f32.mrf.mxu0
  %564 = vdwg.mxu0
  %565 = vmatpush.bf16.msra.mxu0 0
  %566 = vmatpush.bf16.msra.mxu0 0
  %567 = vmatpush.bf16.msra.mxu0 0
  %568 = vmatpush.bf16.msra.mxu0 0
  %569 = vmatpush.bf16.msra.mxu0 %v242
  %570 = vmatpush.bf16.msra.mxu0 %v240
  %571 = vmatpush.bf16.msra.mxu0 %v238
  %572 = vmatpush.bf16.msra.mxu0 %v236
  %573 = vmatmul.bf16.gmra.mxu0 %v550
  %v574 = vpop.f32.mrf.mxu0
  %v575 = vadd.f32 0.0, %v574
  %v576 = vpop.f32.mrf.mxu0
  %577 = vdwg.mxu0
  %v578 = vadd.f32 %v562, %v208
  %v579 = vmul.f32 %v578, 0.5
  %v580 = vtanh.pop %v579
  %v581 = vmul.f32 %v580, 0.5
  %v582 = vadd.f32 %v581, 0.5
  %v583 = vtanh.pop %v578
  %v584 = vmul.f32 %v582, %v509
  %586 = vrot.lane.b32.xlu0 %v583, 32
  %v587 = vpop.permute.xlu0 %586
  %v589 = vmul.f32 %v582, %v587
  %591 = vrot.lane.b32.xlu0 %v589, 32
  %v592 = vpop.permute.xlu0 %591
  %v594 = vadd.f32 %v584, %v592
  %v595 = vtanh.pop %v594
  %597 = vrot.lane.b32.xlu0 %v595, 32
  %v598 = vpop.permute.xlu0 %597
  %v600 = vmul.f32 %v582, %v598
  %v601 = vadd.f32 %v575, %v344
  %v602 = vmul.f32 %v601, 0.5
  %v603 = vtanh.pop %v602
  %v604 = vmul.f32 %v603, 0.5
  %v605 = vadd.f32 %v604, 0.5
  %v606 = vtanh.pop %v601
  %v607 = vmul.f32 %v605, %v532
  %609 = vrot.lane.b32.xlu0 %v606, 32
  %v610 = vpop.permute.xlu0 %609
  %v612 = vmul.f32 %v605, %v610
  %614 = vrot.lane.b32.xlu0 %v612, 32
  %v615 = vpop.permute.xlu0 %614
  %v617 = vadd.f32 %v607, %v615
  %v618 = vtanh.pop %v617
  %620 = vrot.lane.b32.xlu0 %v618, 32
  %v621 = vpop.permute.xlu0 %620
  %v623 = vmul.f32 %v605, %v621
  %625 = vrot.lane.b32.xlu0 %v600, 64
  %v626 = vpop.permute.xlu0 %625
  %629 = vrot.lane.b32.xlu0 %v623, 96
  %v630 = vpop.permute.xlu0 %629
  %v632 = vsel %vm153, %v626, %v630
  %v633 = vpack.c.bf16 %v632, %v632
  %v635 = vsel %vm244, %v633, 0
  %637 = vmatpush.bf16.msra.mxu0 0
  %638 = vmatpush.bf16.msra.mxu0 0
  %639 = vmatpush.bf16.msra.mxu0 0
  %640 = vmatpush.bf16.msra.mxu0 0
  %641 = vmatpush.bf16.msra.mxu0 %v241
  %642 = vmatpush.bf16.msra.mxu0 %v239
  %643 = vmatpush.bf16.msra.mxu0 %v237
  %644 = vmatpush.bf16.msra.mxu0 %v235
  %645 = vmatmul.bf16.gmra.mxu0 %v635
  %v646 = vpop.f32.mrf.mxu0
  %v647 = vadd.f32 0.0, %v646
  %v648 = vpop.f32.mrf.mxu0
  %649 = vdwg.mxu0
  %650 = vmatpush.bf16.msra.mxu0 0
  %651 = vmatpush.bf16.msra.mxu0 0
  %652 = vmatpush.bf16.msra.mxu0 0
  %653 = vmatpush.bf16.msra.mxu0 0
  %654 = vmatpush.bf16.msra.mxu0 %v242
  %655 = vmatpush.bf16.msra.mxu0 %v240
  %656 = vmatpush.bf16.msra.mxu0 %v238
  %657 = vmatpush.bf16.msra.mxu0 %v236
  %658 = vmatmul.bf16.gmra.mxu0 %v635
  %v659 = vpop.f32.mrf.mxu0
  %v660 = vadd.f32 0.0, %v659
  %v661 = vpop.f32.mrf.mxu0
  %662 = vdwg.mxu0
  %v663 = vadd.f32 %v647, %v211
  %v664 = vmul.f32 %v663, 0.5
  %v665 = vtanh.pop %v664
  %v666 = vmul.f32 %v665, 0.5
  %v667 = vadd.f32 %v666, 0.5
  %v668 = vtanh.pop %v663
  %v669 = vmul.f32 %v667, %v594
  %671 = vrot.lane.b32.xlu0 %v668, 32
  %v672 = vpop.permute.xlu0 %671
  %v674 = vmul.f32 %v667, %v672
  %676 = vrot.lane.b32.xlu0 %v674, 32
  %v677 = vpop.permute.xlu0 %676
  %v679 = vadd.f32 %v669, %v677
  %v680 = vtanh.pop %v679
  %682 = vrot.lane.b32.xlu0 %v680, 32
  %v683 = vpop.permute.xlu0 %682
  %v685 = vmul.f32 %v667, %v683
  %v686 = vadd.f32 %v660, %v344
  %v687 = vmul.f32 %v686, 0.5
  %v688 = vtanh.pop %v687
  %v689 = vmul.f32 %v688, 0.5
  %v690 = vadd.f32 %v689, 0.5
  %v691 = vtanh.pop %v686
  %v692 = vmul.f32 %v690, %v617
  %694 = vrot.lane.b32.xlu0 %v691, 32
  %v695 = vpop.permute.xlu0 %694
  %v697 = vmul.f32 %v690, %v695
  %699 = vrot.lane.b32.xlu0 %v697, 32
  %v700 = vpop.permute.xlu0 %699
  %v702 = vadd.f32 %v692, %v700
  %v703 = vtanh.pop %v702
  %705 = vrot.lane.b32.xlu0 %v703, 32
  %v706 = vpop.permute.xlu0 %705
  %v708 = vmul.f32 %v690, %v706
  %710 = vrot.lane.b32.xlu0 %v685, 64
  %v711 = vpop.permute.xlu0 %710
  %714 = vrot.lane.b32.xlu0 %v708, 96
  %v715 = vpop.permute.xlu0 %714
  %v717 = vsel %vm153, %v711, %v715
  %v718 = vpack.c.bf16 %v717, %v717
  %v720 = vsel %vm244, %v718, 0
  %722 = vmatpush.bf16.msra.mxu0 0
  %723 = vmatpush.bf16.msra.mxu0 0
  %724 = vmatpush.bf16.msra.mxu0 0
  %725 = vmatpush.bf16.msra.mxu0 0
  %726 = vmatpush.bf16.msra.mxu0 %v241
  %727 = vmatpush.bf16.msra.mxu0 %v239
  %728 = vmatpush.bf16.msra.mxu0 %v237
  %729 = vmatpush.bf16.msra.mxu0 %v235
  %730 = vmatmul.bf16.gmra.mxu0 %v720
  %v731 = vpop.f32.mrf.mxu0
  %v732 = vadd.f32 0.0, %v731
  %v733 = vpop.f32.mrf.mxu0
  %734 = vdwg.mxu0
  %735 = vmatpush.bf16.msra.mxu0 0
  %736 = vmatpush.bf16.msra.mxu0 0
  %737 = vmatpush.bf16.msra.mxu0 0
  %738 = vmatpush.bf16.msra.mxu0 0
  %739 = vmatpush.bf16.msra.mxu0 %v242
  %740 = vmatpush.bf16.msra.mxu0 %v240
  %741 = vmatpush.bf16.msra.mxu0 %v238
  %742 = vmatpush.bf16.msra.mxu0 %v236
  %743 = vmatmul.bf16.gmra.mxu0 %v720
  %v744 = vpop.f32.mrf.mxu0
  %v745 = vadd.f32 0.0, %v744
  %v746 = vpop.f32.mrf.mxu0
  %747 = vdwg.mxu0
  %v748 = vadd.f32 %v732, %v214
  %v749 = vmul.f32 %v748, 0.5
  %v750 = vtanh.pop %v749
  %v751 = vmul.f32 %v750, 0.5
  %v752 = vadd.f32 %v751, 0.5
  %v753 = vtanh.pop %v748
  %v754 = vmul.f32 %v752, %v679
  %756 = vrot.lane.b32.xlu0 %v753, 32
  %v757 = vpop.permute.xlu0 %756
  %v759 = vmul.f32 %v752, %v757
  %761 = vrot.lane.b32.xlu0 %v759, 32
  %v762 = vpop.permute.xlu0 %761
  %v764 = vadd.f32 %v754, %v762
  %v765 = vtanh.pop %v764
  %767 = vrot.lane.b32.xlu0 %v765, 32
  %v768 = vpop.permute.xlu0 %767
  %v770 = vmul.f32 %v752, %v768
  %v771 = vadd.f32 %v745, %v344
  %v772 = vmul.f32 %v771, 0.5
  %v773 = vtanh.pop %v772
  %v774 = vmul.f32 %v773, 0.5
  %v775 = vadd.f32 %v774, 0.5
  %v776 = vtanh.pop %v771
  %v777 = vmul.f32 %v775, %v702
  %779 = vrot.lane.b32.xlu0 %v776, 32
  %v780 = vpop.permute.xlu0 %779
  %v782 = vmul.f32 %v775, %v780
  %784 = vrot.lane.b32.xlu0 %v782, 32
  %v785 = vpop.permute.xlu0 %784
  %v787 = vadd.f32 %v777, %v785
  %v788 = vtanh.pop %v787
  %790 = vrot.lane.b32.xlu0 %v788, 32
  %v791 = vpop.permute.xlu0 %790
  %v793 = vmul.f32 %v775, %v791
  %795 = vrot.lane.b32.xlu0 %v770, 64
  %v796 = vpop.permute.xlu0 %795
  %799 = vrot.lane.b32.xlu0 %v793, 96
  %v800 = vpop.permute.xlu0 %799
  %v802 = vsel %vm153, %v796, %v800
  %v803 = vpack.c.bf16 %v802, %v802
  %v805 = vsel %vm244, %v803, 0
  %807 = vmatpush.bf16.msra.mxu0 0
  %808 = vmatpush.bf16.msra.mxu0 0
  %809 = vmatpush.bf16.msra.mxu0 0
  %810 = vmatpush.bf16.msra.mxu0 0
  %811 = vmatpush.bf16.msra.mxu0 %v241
  %812 = vmatpush.bf16.msra.mxu0 %v239
  %813 = vmatpush.bf16.msra.mxu0 %v237
  %814 = vmatpush.bf16.msra.mxu0 %v235
  %815 = vmatmul.bf16.gmra.mxu0 %v805
  %v816 = vpop.f32.mrf.mxu0
  %v817 = vadd.f32 0.0, %v816
  %v818 = vpop.f32.mrf.mxu0
  %819 = vdwg.mxu0
  %820 = vmatpush.bf16.msra.mxu0 0
  %821 = vmatpush.bf16.msra.mxu0 0
  %822 = vmatpush.bf16.msra.mxu0 0
  %823 = vmatpush.bf16.msra.mxu0 0
  %824 = vmatpush.bf16.msra.mxu0 %v242
  %825 = vmatpush.bf16.msra.mxu0 %v240
  %826 = vmatpush.bf16.msra.mxu0 %v238
  %827 = vmatpush.bf16.msra.mxu0 %v236
  %828 = vmatmul.bf16.gmra.mxu0 %v805
  %v829 = vpop.f32.mrf.mxu0
  %v830 = vadd.f32 0.0, %v829
  %v831 = vpop.f32.mrf.mxu0
  %832 = vdwg.mxu0
  %v833 = vadd.f32 %v817, %v217
  %v834 = vmul.f32 %v833, 0.5
  %v835 = vtanh.pop %v834
  %v836 = vmul.f32 %v835, 0.5
  %v837 = vadd.f32 %v836, 0.5
  %v838 = vtanh.pop %v833
  %v839 = vmul.f32 %v837, %v764
  %841 = vrot.lane.b32.xlu0 %v838, 32
  %v842 = vpop.permute.xlu0 %841
  %v844 = vmul.f32 %v837, %v842
  %846 = vrot.lane.b32.xlu0 %v844, 32
  %v847 = vpop.permute.xlu0 %846
  %v849 = vadd.f32 %v839, %v847
  %v850 = vtanh.pop %v849
  %852 = vrot.lane.b32.xlu0 %v850, 32
  %v853 = vpop.permute.xlu0 %852
  %v855 = vmul.f32 %v837, %v853
  %v856 = vadd.f32 %v830, %v344
  %v857 = vmul.f32 %v856, 0.5
  %v858 = vtanh.pop %v857
  %v859 = vmul.f32 %v858, 0.5
  %v860 = vadd.f32 %v859, 0.5
  %v861 = vtanh.pop %v856
  %v862 = vmul.f32 %v860, %v787
  %864 = vrot.lane.b32.xlu0 %v861, 32
  %v865 = vpop.permute.xlu0 %864
  %v867 = vmul.f32 %v860, %v865
  %869 = vrot.lane.b32.xlu0 %v867, 32
  %v870 = vpop.permute.xlu0 %869
  %v872 = vadd.f32 %v862, %v870
  %v873 = vtanh.pop %v872
  %875 = vrot.lane.b32.xlu0 %v873, 32
  %v876 = vpop.permute.xlu0 %875
  %v878 = vmul.f32 %v860, %v876
  %880 = vrot.lane.b32.xlu0 %v855, 64
  %v881 = vpop.permute.xlu0 %880
  %884 = vrot.lane.b32.xlu0 %v878, 96
  %v885 = vpop.permute.xlu0 %884
  %v887 = vsel %vm153, %v881, %v885
  %v888 = vpack.c.bf16 %v887, %v887
  %v890 = vsel %vm244, %v888, 0
  %892 = vmatpush.bf16.msra.mxu0 0
  %893 = vmatpush.bf16.msra.mxu0 0
  %894 = vmatpush.bf16.msra.mxu0 0
  %895 = vmatpush.bf16.msra.mxu0 0
  %896 = vmatpush.bf16.msra.mxu0 %v242
  %897 = vmatpush.bf16.msra.mxu0 %v240
  %898 = vmatpush.bf16.msra.mxu0 %v238
  %899 = vmatpush.bf16.msra.mxu0 %v236
  %900 = vmatmul.bf16.gmra.mxu0 %v890
  %v901 = vpop.f32.mrf.mxu0
  %v902 = vadd.f32 0.0, %v901
  %v903 = vpop.f32.mrf.mxu0
  %904 = vdwg.mxu0
  %v905 = vadd.f32 %v902, %v344
  %v906 = vmul.f32 %v905, 0.5
  %v907 = vtanh.pop %v906
  %v908 = vmul.f32 %v907, 0.5
  %v909 = vadd.f32 %v908, 0.5
  %v910 = vtanh.pop %v905
  %v911 = vmul.f32 %v909, %v872
  %913 = vrot.lane.b32.xlu0 %v910, 32
  %v914 = vpop.permute.xlu0 %913
  %v916 = vmul.f32 %v909, %v914
  %918 = vrot.lane.b32.xlu0 %v916, 32
  %v919 = vpop.permute.xlu0 %918
  %v921 = vadd.f32 %v911, %v919
  %v922 = vtanh.pop %v921
  %924 = vrot.lane.b32.xlu0 %v922, 32
  %v925 = vpop.permute.xlu0 %924
  %v927 = vmul.f32 %v909, %v925
  %v928 = vld [vmem:[%s6] sm:$0xff]
  %v929 = vld [vmem:[%s6 + $0x8] sm:$0xff]
  %v930 = vld [vmem:[%s6 + $0x10] sm:$0xff]
  %v931 = vld [vmem:[%s6 + $0x18] sm:$0xff]
  %v932 = vld [vmem:[%s7] sm:$0x1]
  %v934 = vperm.slane %v932, 0
  %937 = vrot.lane.b32.xlu0 %v368, 64
  %v938 = vpop.permute.xlu0 %937
  %939 = vrot.lane.b32.xlu0 %v453, 64
  %v940 = vpop.permute.xlu0 %939
  %941 = vrot.lane.b32.xlu0 %v538, 64
  %v942 = vpop.permute.xlu0 %941
  %943 = vrot.lane.b32.xlu0 %v623, 64
  %v944 = vpop.permute.xlu0 %943
  %945 = vrot.lane.b32.xlu0 %v708, 64
  %v946 = vpop.permute.xlu0 %945
  %947 = vrot.lane.b32.xlu0 %v793, 64
  %v948 = vpop.permute.xlu0 %947
  %949 = vrot.lane.b32.xlu0 %v878, 64
  %v950 = vpop.permute.xlu0 %949
  %951 = vrot.lane.b32.xlu0 %v927, 64
  %v952 = vpop.permute.xlu0 %951
  %v953 = vsel %vm153, %v938, 0
  %v955 = vsel %vm153, %v940, 0
  %v957 = vsel %vm153, %v942, 0
  %v959 = vsel %vm153, %v944, 0
  %v961 = vsel %vm153, %v946, 0
  %v963 = vsel %vm153, %v948, 0
  %v965 = vsel %vm153, %v950, 0
  %v967 = vsel %vm153, %v952, 0
  %969 = vmatpush.msra.mxu0 0.0
  %970 = vmatpush.msra.mxu0 0.0
  %971 = vmatpush.msra.mxu0 0.0
  %972 = vmatpush.msra.mxu0 0.0
  %973 = vmatpush.msra.mxu0 0.0
  %974 = vmatpush.msra.mxu0 0.0
  %975 = vmatpush.msra.mxu0 0.0
  %976 = vmatpush.msra.mxu0 0.0
  %977 = vmatpush.msra.mxu0 0.0
  %978 = vmatpush.msra.mxu0 0.0
  %979 = vmatpush.msra.mxu0 0.0
  %980 = vmatpush.msra.mxu0 0.0
  %981 = vmatpush.msra.mxu0 %v931
  %982 = vmatpush.msra.mxu0 %v930
  %983 = vmatpush.msra.mxu0 %v929
  %984 = vmatpush.msra.mxu0 %v928
  %985 = vmatmul.f32.gmra.mxu0 %v953
  %v986 = vpop.f32.mrf.mxu0
  %v987 = vadd.f32 %v934, %v986
  %988 = vmatmul.f32.gmra.mxu0 %v955
  %v989 = vpop.f32.mrf.mxu0
  %v990 = vadd.f32 %v934, %v989
  %991 = vmatmul.f32.gmra.mxu0 %v957
  %v992 = vpop.f32.mrf.mxu0
  %v993 = vadd.f32 %v934, %v992
  %994 = vmatmul.f32.gmra.mxu0 %v959
  %v995 = vpop.f32.mrf.mxu0
  %v996 = vadd.f32 %v934, %v995
  %997 = vmatmul.f32.gmra.mxu0 %v961
  %v998 = vpop.f32.mrf.mxu0
  %v999 = vadd.f32 %v934, %v998
  %1000 = vmatmul.f32.gmra.mxu0 %v963
  %v1001 = vpop.f32.mrf.mxu0
  %v1002 = vadd.f32 %v934, %v1001
  %1003 = vmatmul.f32.gmra.mxu0 %v965
  %v1004 = vpop.f32.mrf.mxu0
  %v1005 = vadd.f32 %v934, %v1004
  %1006 = vmatmul.f32.gmra.mxu0 %v967
  %v1007 = vpop.f32.mrf.mxu0
  %v1008 = vadd.f32 %v934, %v1007
  %1009 = vdwg.mxu0
  %1010 = vst [vmem:[%s8] sm:$0xff] %v987
  %1011 = vst [vmem:[%s8 + $0x8] sm:$0xff] %v990
  %1012 = vst [vmem:[%s8 + $0x10] sm:$0xff] %v993
  %1013 = vst [vmem:[%s8 + $0x18] sm:$0xff] %v996
  %1014 = vst [vmem:[%s8 + $0x20] sm:$0xff] %v999
  %1015 = vst [vmem:[%s8 + $0x28] sm:$0xff] %v1002
  %1016 = vst [vmem:[%s8 + $0x30] sm:$0xff] %v1005
  %1017 = vst [vmem:[%s8 + $0x38] sm:$0xff] %v1008
  // Predicated region
  $region34: #{rnnlm_forward.1} parent=0 // pred_check
    _
  $region35: #{rnnlm_forward.1} parent=0 // pred_check_branch
    %1019 = sbr.rel (0) target = $region37
  $region36: #{rnnlm_forward.1} parent=0 // pred_region
    _
  $region37: #{rnnlm_forward.1} parent=0 // pred_fallthru
    _
  // Predicated region
  $region38: #{rnnlm_forward.1} parent=0 // pred_check
    _
  $region39: #{rnnlm_forward.1} parent=0 // pred_check_branch
    %1021 = sbr.rel (0) target = $region41
  $region40: #{rnnlm_forward.1} parent=0 // pred_region
    _
  $region41: #{rnnlm_forward.1} parent=0 // pred_fallthru
    _

</llo_original>
